<compile_context>
chip_gen: v7x
topology: tpu7x:2x2x1
jax: 0.10.0
libtpu: 0.0.40
codegen_flags: <defaults>
</compile_context>

<pallas_src>
import functools

import jax
import jax.numpy as jnp
from jax.experimental import pallas as pl
from jax.experimental.pallas import tpu as pltpu


def _round_up(v, m):
    return (v + m - 1) // m * m


def _pad_axis(a, axis, target):
    if a.shape[axis] == target:
        return a
    widths = [(0, 0)] * a.ndim
    widths[axis] = (0, target - a.shape[axis])
    return jnp.pad(a, widths)


def _block_kernel(x_ref, w1_ref, b1_ref, w2_ref, b2_ref, o_ref, *,
                  img_w, compute_dtype):
    # x_ref : (bt, Cin, HWp)      native dtype; channels on sublanes, H*W
    #                             (lane-padded to %128) on lanes.
    # w1_ref: (9, Cmid_p, Cin)    tap-major (t = kh*3 + kw), compute dtype.
    # b1_ref: (Cmid_p, 1)  f32
    # w2_ref: (9, Cout_p, Cmid_p) compute dtype.
    # b2_ref: (Cout_p, 1)  f32
    # o_ref : (bt, Cout_p, HWp)   lane-dense store; border/pad lanes are
    #                             cropped in the wrapper.
    bt, _, hw = x_ref.shape

    def conv9(a, w_ref):
        # Per-tap accumulation: 9 small MXU matmuls into one f32 accumulator.
        # Tap (kh, kw) aligns a[:, o + kh*W + kw] onto lane o via an XLU lane
        # rotation.  Wrap-around only lands in lanes that are cropped later.
        # On v7x the back-to-back dots accumulate in place in the MRB; on
        # v5e/v6e the per-tap add rides the (slack) VALU slot.
        acc = jnp.dot(w_ref[0], a, preferred_element_type=jnp.float32)
        for t in range(1, 9):
            off = (t // 3) * img_w + (t % 3)
            at = pltpu.roll(a, shift=hw - off, axis=1)
            acc = acc + jnp.dot(w_ref[t], at,
                                preferred_element_type=jnp.float32)
        return acc

    @pl.loop(0, bt)  # rolled loop: per-image live ranges stay bounded
    def _(i):
        x_img = x_ref[i].astype(compute_dtype)            # in-kernel cast (VPU)
        h = jnp.maximum(conv9(x_img, w1_ref) + b1_ref[...], 0.0)   # f32 bias+ReLU
        out = conv9(h.astype(compute_dtype), w2_ref) + b2_ref[...]
        o_ref[i] = out.astype(o_ref.dtype)


@functools.partial(jax.jit, static_argnames=("compute_dtype", "bt"))
def block_forward(x_nchw, w1_oihw, b1, w2_oihw, b2, *,
                  compute_dtype=jnp.float32, bt=None):
    """Fused conv(3x3,VALID) -> ReLU -> conv(3x3,VALID).

    x_nchw: (N, Cin, H, W); w*_oihw: (Cout, Cin, 3, 3) (PyTorch layout);
    b*: (Cout,). Returns (N, Cout, H-4, W-4) in x_nchw.dtype.
    Note: with compute_dtype=bfloat16 conv1 activations are rounded to bf16
    before conv2 (intentional; accumulation, bias and ReLU stay f32).
    """
    N, Cin, H, W = x_nchw.shape
    Cmid, Cout = w1_oihw.shape[0], w2_oihw.shape[0]
    HW = H * W
    HWp = _round_up(HW, 128)

    # dtype-aware padding of the matmul OUTPUT channel dims (bf16 packs two
    # rows per sublane -> 16; int8/fp8 would be 32).  Contraction dims keep
    # the real channel counts, so x itself needs no channel padding.
    pack = {1: 32, 2: 16, 4: 8}[jnp.dtype(compute_dtype).itemsize]
    cmid_p = _round_up(Cmid, pack)
    cout_p = _round_up(Cout, pack)

    # Input: free reshape NCHW -> (N, Cin, H*W); lane-pad only if HW % 128 != 0.
    # No transpose, no wrapper-side dtype cast.
    x_flat = _pad_axis(x_nchw.reshape(N, Cin, HW), 2, HWp)

    # Weights -> tap-major stacks (tiny tensors, negligible cost).
    w1t = jnp.transpose(w1_oihw, (2, 3, 0, 1)).reshape(9, Cmid, Cin)
    w1t = _pad_axis(w1t, 1, cmid_p).astype(compute_dtype)
    w2t = jnp.transpose(w2_oihw, (2, 3, 0, 1)).reshape(9, Cout, Cmid)
    w2t = _pad_axis(_pad_axis(w2t, 1, cout_p), 2, cmid_p).astype(compute_dtype)
    b1c = _pad_axis(b1, 0, cmid_p).reshape(cmid_p, 1).astype(jnp.float32)
    b2c = _pad_axis(b2, 0, cout_p).reshape(cout_p, 1).astype(jnp.float32)

    # Batch tile from a VMEM byte budget (fits v5e's 16 MiB scoped default and
    # v7x's 64 MiB physical with headroom).  Prefer >=4 grid steps (2 per
    # TensorCore on v7x for pipelining + load balance), then >=2, then the
    # largest tile that fits.
    if bt is None:
        x_b = jnp.dtype(x_nchw.dtype).itemsize
        c_b = jnp.dtype(compute_dtype).itemsize
        blk_img = HWp * (Cin + cout_p) * x_b * 2          # double-buffered in+out
        tmp = HWp * ((cmid_p + cout_p) * 4 + (Cin + 2 * cmid_p) * c_b)
        budget = 12 * 1024 * 1024
        bt = 1
        for min_steps in (4, 2, 1):
            cands = [c for c in range(N, 0, -1)
                     if N % c == 0 and N // c >= min_steps
                     and c * blk_img + tmp <= budget]
            if cands:
                bt = cands[0]
                break
    assert N % bt == 0, (N, bt)
    # TODO(synk): if even bt=1 exceeds the budget (very large H*W), tile the
    # spatial axis as well instead of using one huge lane block per image.

    out_flat = pl.pallas_call(
        functools.partial(_block_kernel, img_w=W, compute_dtype=compute_dtype),
        out_shape=jax.ShapeDtypeStruct((N, cout_p, HWp), x_nchw.dtype),
        grid_spec=pl.GridSpec(
            grid=(N // bt,),
            in_specs=[
                pl.BlockSpec((bt, Cin, HWp), lambda n: (n, 0, 0)),
                pl.BlockSpec((9, cmid_p, Cin), lambda n: (0, 0, 0)),
                pl.BlockSpec((cmid_p, 1), lambda n: (0, 0)),
                pl.BlockSpec((9, cout_p, cmid_p), lambda n: (0, 0, 0)),
                pl.BlockSpec((cout_p, 1), lambda n: (0, 0)),
            ],
            out_specs=pl.BlockSpec((bt, cout_p, HWp), lambda n: (n, 0, 0)),
        ),
        compiler_params=pltpu.CompilerParams(
            dimension_semantics=("parallel",),
            # Explicit scoped-VMEM limit: safe on v5e/v6e (128 MiB physical)
            # and leaves 50% headroom on v7x's 64 MiB.
            vmem_limit_bytes=32 * 1024 * 1024,
        ),
    )(x_flat, w1t, b1c, w2t, b2c)

    # Crop: drop channel/lane padding and the conv borders.  Reshape is free;
    # there is no transpose back (output is already NCHW-native).
    out = out_flat[:, :Cout, :HW].reshape(N, Cout, H, W)
    return out[:, :, :H - 4, :W - 4]


def _reference(x_nchw, w1_oihw, b1, w2_oihw, b2):
    dn = ("NCHW", "OIHW", "NCHW")
    y = jax.lax.conv_general_dilated(x_nchw, w1_oihw, (1, 1), "VALID",
                                     dimension_numbers=dn)
    y = jnp.maximum(y + b1[None, :, None, None], 0.0)
    y = jax.lax.conv_general_dilated(y, w2_oihw, (1, 1), "VALID",
                                     dimension_numbers=dn)
    return y + b2[None, :, None, None]


if __name__ == "__main__":
    # --- Block(in_ch=4, out_ch=8) on (2, 4, 16, 16) ---
    N, Cin, Cch, H, W = 2, 4, 8, 16, 16
    kx, kw1, kb1, kw2, kb2 = jax.random.split(jax.random.PRNGKey(0), 5)
    x = jax.random.normal(kx, (N, Cin, H, W), jnp.float32)
    w1 = jax.random.normal(kw1, (Cch, Cin, 3, 3), jnp.float32) * 0.1
    b1 = jax.random.normal(kb1, (Cch,), jnp.float32) * 0.1
    w2 = jax.random.normal(kw2, (Cch, Cch, 3, 3), jnp.float32) * 0.1
    b2 = jax.random.normal(kb2, (Cch,), jnp.float32) * 0.1
    ref = _reference(x, w1, b1, w2, b2)

    out_f32 = jax.block_until_ready(block_forward(x, w1, b1, w2, b2))
    assert out_f32.shape == (N, Cch, H - 4, W - 4), out_f32.shape
    assert jnp.allclose(out_f32, ref, atol=1e-4, rtol=1e-4), "f32 mismatch"

    # bf16 MXU operands (f32 accumulate / bias / ReLU) — valid on all gens.
    out_bf16 = jax.block_until_ready(
        block_forward(x, w1, b1, w2, b2, compute_dtype=jnp.bfloat16))
    assert out_bf16.shape == (N, Cch, H - 4, W - 4), out_bf16.shape
    assert jnp.allclose(out_bf16, ref, atol=5e-2, rtol=5e-2), "bf16 mismatch"

    # --- rectangular H,W (HW % 128 != 0 -> lane-pad path) with bt > 1 ---
    N2, Cin2, Cch2, H2, W2 = 4, 4, 6, 12, 20
    kx2, kw12, kb12, kw22, kb22 = jax.random.split(jax.random.PRNGKey(1), 5)
    x2 = jax.random.normal(kx2, (N2, Cin2, H2, W2), jnp.float32)
    w12 = jax.random.normal(kw12, (Cch2, Cin2, 3, 3), jnp.float32) * 0.1
    b12 = jax.random.normal(kb12, (Cch2,), jnp.float32) * 0.1
    w22 = jax.random.normal(kw22, (Cch2, Cch2, 3, 3), jnp.float32) * 0.1
    b22 = jax.random.normal(kb22, (Cch2,), jnp.float32) * 0.1
    ref2 = _reference(x2, w12, b12, w22, b22)
    out2 = jax.block_until_ready(block_forward(x2, w12, b12, w22, b22, bt=2))
    assert out2.shape == (N2, Cch2, H2 - 4, W2 - 4), out2.shape
    assert jnp.allclose(out2, ref2, atol=1e-4, rtol=1e-4), "rect/bt>1 mismatch"

    print("KERNEL_OK")
</pallas_src>

<mosaic_0001>
module attributes {stable_mosaic.version = 11 : i64} {
  func.func @_block_kernel(%arg0: i32, %arg1: memref<1x4x256xf32, #tpu.memory_space<vmem>>, %arg2: memref<9x8x4xf32, #tpu.memory_space<vmem>>, %arg3: memref<8x1xf32, #tpu.memory_space<vmem>>, %arg4: memref<9x8x8xf32, #tpu.memory_space<vmem>>, %arg5: memref<8x1xf32, #tpu.memory_space<vmem>>, %arg6: memref<1x8x256xf32, #tpu.memory_space<vmem>>) attributes {dimension_semantics = [#tpu.dimension_semantics<parallel>], iteration_bounds = array<i64: 2>, scalar_prefetch = 0 : i64, scratch_operands = 0 : i64, tpu.core_type = #tpu.core_type<tc>, window_params = [{transform_indices = @transform_0, window_bounds = array<i64: 1, 4, 256>}, {pipeline_mode = #tpu.pipeline_mode<synchronous>, transform_indices = @transform_1, window_bounds = array<i64: 9, 8, 4>}, {pipeline_mode = #tpu.pipeline_mode<synchronous>, transform_indices = @transform_2, window_bounds = array<i64: 8, 1>}, {pipeline_mode = #tpu.pipeline_mode<synchronous>, transform_indices = @transform_3, window_bounds = array<i64: 9, 8, 8>}, {pipeline_mode = #tpu.pipeline_mode<synchronous>, transform_indices = @transform_4, window_bounds = array<i64: 8, 1>}, {transform_indices = @transform_5, window_bounds = array<i64: 1, 8, 256>}]} {
    %c0_i32 = arith.constant 0 : i32
    %c1_i32 = arith.constant 1 : i32
    %0 = arith.muli %c0_i32, %c1_i32 : i32
    %c0_i32_0 = arith.constant 0 : i32
    %1 = arith.addi %c0_i32_0, %0 : i32
    %2 = arith.index_cast %1 : i32 to index
    %c0 = arith.constant 0 : index
    %c0_1 = arith.constant 0 : index
    %3 = vector.load %arg1[%2, %c0, %c0_1] : memref<1x4x256xf32, #tpu.memory_space<vmem>>, vector<1x4x256xf32>
    %4 = vector.shape_cast %3 : vector<1x4x256xf32> to vector<4x256xf32>
    %c0_2 = arith.constant 0 : index
    %c0_3 = arith.constant 0 : index
    %c0_4 = arith.constant 0 : index
    %5 = vector.load %arg2[%c0_2, %c0_3, %c0_4] : memref<9x8x4xf32, #tpu.memory_space<vmem>>, vector<1x8x4xf32>
    %6 = vector.shape_cast %5 : vector<1x8x4xf32> to vector<8x4xf32>
    %cst = arith.constant dense<0.000000e+00> : vector<8x256xf32>
    %7 = tpu.matmul %6, %4, %cst {dimension_numbers = #tpu.dot_dimension_numbers<[1], [0], [0], [1], [0, 0, 1, 1], [], []>} : vector<8x4xf32>, vector<4x256xf32>, vector<8x256xf32> -> vector<8x256xf32>
    %c255_i32 = arith.constant 255 : i32
    %8 = tpu.dynamic_rotate %4 by %c255_i32 dim 1 : vector<4x256xf32>, i32 -> vector<4x256xf32>
    %c1 = arith.constant 1 : index
    %c0_5 = arith.constant 0 : index
    %c0_6 = arith.constant 0 : index
    %9 = vector.load %arg2[%c1, %c0_5, %c0_6] : memref<9x8x4xf32, #tpu.memory_space<vmem>>, vector<1x8x4xf32>
    %10 = vector.shape_cast %9 : vector<1x8x4xf32> to vector<8x4xf32>
    %cst_7 = arith.constant dense<0.000000e+00> : vector<8x256xf32>
    %11 = tpu.matmul %10, %8, %cst_7 {dimension_numbers = #tpu.dot_dimension_numbers<[1], [0], [0], [1], [0, 0, 1, 1], [], []>} : vector<8x4xf32>, vector<4x256xf32>, vector<8x256xf32> -> vector<8x256xf32>
    %12 = arith.addf %7, %11 : vector<8x256xf32>
    %c254_i32 = arith.constant 254 : i32
    %13 = tpu.dynamic_rotate %4 by %c254_i32 dim 1 : vector<4x256xf32>, i32 -> vector<4x256xf32>
    %c2 = arith.constant 2 : index
    %c0_8 = arith.constant 0 : index
    %c0_9 = arith.constant 0 : index
    %14 = vector.load %arg2[%c2, %c0_8, %c0_9] : memref<9x8x4xf32, #tpu.memory_space<vmem>>, vector<1x8x4xf32>
    %15 = vector.shape_cast %14 : vector<1x8x4xf32> to vector<8x4xf32>
    %cst_10 = arith.constant dense<0.000000e+00> : vector<8x256xf32>
    %16 = tpu.matmul %15, %13, %cst_10 {dimension_numbers = #tpu.dot_dimension_numbers<[1], [0], [0], [1], [0, 0, 1, 1], [], []>} : vector<8x4xf32>, vector<4x256xf32>, vector<8x256xf32> -> vector<8x256xf32>
    %17 = arith.addf %12, %16 : vector<8x256xf32>
    %c240_i32 = arith.constant 240 : i32
    %18 = tpu.dynamic_rotate %4 by %c240_i32 dim 1 : vector<4x256xf32>, i32 -> vector<4x256xf32>
    %c3 = arith.constant 3 : index
    %c0_11 = arith.constant 0 : index
    %c0_12 = arith.constant 0 : index
    %19 = vector.load %arg2[%c3, %c0_11, %c0_12] : memref<9x8x4xf32, #tpu.memory_space<vmem>>, vector<1x8x4xf32>
    %20 = vector.shape_cast %19 : vector<1x8x4xf32> to vector<8x4xf32>
    %cst_13 = arith.constant dense<0.000000e+00> : vector<8x256xf32>
    %21 = tpu.matmul %20, %18, %cst_13 {dimension_numbers = #tpu.dot_dimension_numbers<[1], [0], [0], [1], [0, 0, 1, 1], [], []>} : vector<8x4xf32>, vector<4x256xf32>, vector<8x256xf32> -> vector<8x256xf32>
    %22 = arith.addf %17, %21 : vector<8x256xf32>
    %c239_i32 = arith.constant 239 : i32
    %23 = tpu.dynamic_rotate %4 by %c239_i32 dim 1 : vector<4x256xf32>, i32 -> vector<4x256xf32>
    %c4 = arith.constant 4 : index
    %c0_14 = arith.constant 0 : index
    %c0_15 = arith.constant 0 : index
    %24 = vector.load %arg2[%c4, %c0_14, %c0_15] : memref<9x8x4xf32, #tpu.memory_space<vmem>>, vector<1x8x4xf32>
    %25 = vector.shape_cast %24 : vector<1x8x4xf32> to vector<8x4xf32>
    %cst_16 = arith.constant dense<0.000000e+00> : vector<8x256xf32>
    %26 = tpu.matmul %25, %23, %cst_16 {dimension_numbers = #tpu.dot_dimension_numbers<[1], [0], [0], [1], [0, 0, 1, 1], [], []>} : vector<8x4xf32>, vector<4x256xf32>, vector<8x256xf32> -> vector<8x256xf32>
    %27 = arith.addf %22, %26 : vector<8x256xf32>
    %c238_i32 = arith.constant 238 : i32
    %28 = tpu.dynamic_rotate %4 by %c238_i32 dim 1 : vector<4x256xf32>, i32 -> vector<4x256xf32>
    %c5 = arith.constant 5 : index
    %c0_17 = arith.constant 0 : index
    %c0_18 = arith.constant 0 : index
    %29 = vector.load %arg2[%c5, %c0_17, %c0_18] : memref<9x8x4xf32, #tpu.memory_space<vmem>>, vector<1x8x4xf32>
    %30 = vector.shape_cast %29 : vector<1x8x4xf32> to vector<8x4xf32>
    %cst_19 = arith.constant dense<0.000000e+00> : vector<8x256xf32>
    %31 = tpu.matmul %30, %28, %cst_19 {dimension_numbers = #tpu.dot_dimension_numbers<[1], [0], [0], [1], [0, 0, 1, 1], [], []>} : vector<8x4xf32>, vector<4x256xf32>, vector<8x256xf32> -> vector<8x256xf32>
    %32 = arith.addf %27, %31 : vector<8x256xf32>
    %c224_i32 = arith.constant 224 : i32
    %33 = tpu.dynamic_rotate %4 by %c224_i32 dim 1 : vector<4x256xf32>, i32 -> vector<4x256xf32>
    %c6 = arith.constant 6 : index
    %c0_20 = arith.constant 0 : index
    %c0_21 = arith.constant 0 : index
    %34 = vector.load %arg2[%c6, %c0_20, %c0_21] : memref<9x8x4xf32, #tpu.memory_space<vmem>>, vector<1x8x4xf32>
    %35 = vector.shape_cast %34 : vector<1x8x4xf32> to vector<8x4xf32>
    %cst_22 = arith.constant dense<0.000000e+00> : vector<8x256xf32>
    %36 = tpu.matmul %35, %33, %cst_22 {dimension_numbers = #tpu.dot_dimension_numbers<[1], [0], [0], [1], [0, 0, 1, 1], [], []>} : vector<8x4xf32>, vector<4x256xf32>, vector<8x256xf32> -> vector<8x256xf32>
    %37 = arith.addf %32, %36 : vector<8x256xf32>
    %c223_i32 = arith.constant 223 : i32
    %38 = tpu.dynamic_rotate %4 by %c223_i32 dim 1 : vector<4x256xf32>, i32 -> vector<4x256xf32>
    %c7 = arith.constant 7 : index
    %c0_23 = arith.constant 0 : index
    %c0_24 = arith.constant 0 : index
    %39 = vector.load %arg2[%c7, %c0_23, %c0_24] : memref<9x8x4xf32, #tpu.memory_space<vmem>>, vector<1x8x4xf32>
    %40 = vector.shape_cast %39 : vector<1x8x4xf32> to vector<8x4xf32>
    %cst_25 = arith.constant dense<0.000000e+00> : vector<8x256xf32>
    %41 = tpu.matmul %40, %38, %cst_25 {dimension_numbers = #tpu.dot_dimension_numbers<[1], [0], [0], [1], [0, 0, 1, 1], [], []>} : vector<8x4xf32>, vector<4x256xf32>, vector<8x256xf32> -> vector<8x256xf32>
    %42 = arith.addf %37, %41 : vector<8x256xf32>
    %c222_i32 = arith.constant 222 : i32
    %43 = tpu.dynamic_rotate %4 by %c222_i32 dim 1 : vector<4x256xf32>, i32 -> vector<4x256xf32>
    %c8 = arith.constant 8 : index
    %c0_26 = arith.constant 0 : index
    %c0_27 = arith.constant 0 : index
    %44 = vector.load %arg2[%c8, %c0_26, %c0_27] : memref<9x8x4xf32, #tpu.memory_space<vmem>>, vector<1x8x4xf32>
    %45 = vector.shape_cast %44 : vector<1x8x4xf32> to vector<8x4xf32>
    %cst_28 = arith.constant dense<0.000000e+00> : vector<8x256xf32>
    %46 = tpu.matmul %45, %43, %cst_28 {dimension_numbers = #tpu.dot_dimension_numbers<[1], [0], [0], [1], [0, 0, 1, 1], [], []>} : vector<8x4xf32>, vector<4x256xf32>, vector<8x256xf32> -> vector<8x256xf32>
    %47 = arith.addf %42, %46 : vector<8x256xf32>
    %c0_29 = arith.constant 0 : index
    %c0_30 = arith.constant 0 : index
    %48 = vector.load %arg3[%c0_29, %c0_30] : memref<8x1xf32, #tpu.memory_space<vmem>>, vector<8x1xf32>
    %49 = vector.broadcast %48 : vector<8x1xf32> to vector<8x256xf32>
    %50 = arith.addf %47, %49 : vector<8x256xf32>
    %cst_31 = arith.constant 0.000000e+00 : f32
    %51 = vector.broadcast %cst_31 : f32 to vector<8x256xf32>
    %52 = arith.maximumf %50, %51 : vector<8x256xf32>
    %c0_32 = arith.constant 0 : index
    %c0_33 = arith.constant 0 : index
    %c0_34 = arith.constant 0 : index
    %53 = vector.load %arg4[%c0_32, %c0_33, %c0_34] : memref<9x8x8xf32, #tpu.memory_space<vmem>>, vector<1x8x8xf32>
    %54 = vector.shape_cast %53 : vector<1x8x8xf32> to vector<8x8xf32>
    %cst_35 = arith.constant dense<0.000000e+00> : vector<8x256xf32>
    %55 = tpu.matmul %54, %52, %cst_35 {dimension_numbers = #tpu.dot_dimension_numbers<[1], [0], [0], [1], [0, 0, 1, 1], [], []>} : vector<8x8xf32>, vector<8x256xf32>, vector<8x256xf32> -> vector<8x256xf32>
    %c255_i32_36 = arith.constant 255 : i32
    %56 = tpu.dynamic_rotate %52 by %c255_i32_36 dim 1 : vector<8x256xf32>, i32 -> vector<8x256xf32>
    %c1_37 = arith.constant 1 : index
    %c0_38 = arith.constant 0 : index
    %c0_39 = arith.constant 0 : index
    %57 = vector.load %arg4[%c1_37, %c0_38, %c0_39] : memref<9x8x8xf32, #tpu.memory_space<vmem>>, vector<1x8x8xf32>
    %58 = vector.shape_cast %57 : vector<1x8x8xf32> to vector<8x8xf32>
    %cst_40 = arith.constant dense<0.000000e+00> : vector<8x256xf32>
    %59 = tpu.matmul %58, %56, %cst_40 {dimension_numbers = #tpu.dot_dimension_numbers<[1], [0], [0], [1], [0, 0, 1, 1], [], []>} : vector<8x8xf32>, vector<8x256xf32>, vector<8x256xf32> -> vector<8x256xf32>
    %60 = arith.addf %55, %59 : vector<8x256xf32>
    %c254_i32_41 = arith.constant 254 : i32
    %61 = tpu.dynamic_rotate %52 by %c254_i32_41 dim 1 : vector<8x256xf32>, i32 -> vector<8x256xf32>
    %c2_42 = arith.constant 2 : index
    %c0_43 = arith.constant 0 : index
    %c0_44 = arith.constant 0 : index
    %62 = vector.load %arg4[%c2_42, %c0_43, %c0_44] : memref<9x8x8xf32, #tpu.memory_space<vmem>>, vector<1x8x8xf32>
    %63 = vector.shape_cast %62 : vector<1x8x8xf32> to vector<8x8xf32>
    %cst_45 = arith.constant dense<0.000000e+00> : vector<8x256xf32>
    %64 = tpu.matmul %63, %61, %cst_45 {dimension_numbers = #tpu.dot_dimension_numbers<[1], [0], [0], [1], [0, 0, 1, 1], [], []>} : vector<8x8xf32>, vector<8x256xf32>, vector<8x256xf32> -> vector<8x256xf32>
    %65 = arith.addf %60, %64 : vector<8x256xf32>
    %c240_i32_46 = arith.constant 240 : i32
    %66 = tpu.dynamic_rotate %52 by %c240_i32_46 dim 1 : vector<8x256xf32>, i32 -> vector<8x256xf32>
    %c3_47 = arith.constant 3 : index
    %c0_48 = arith.constant 0 : index
    %c0_49 = arith.constant 0 : index
    %67 = vector.load %arg4[%c3_47, %c0_48, %c0_49] : memref<9x8x8xf32, #tpu.memory_space<vmem>>, vector<1x8x8xf32>
    %68 = vector.shape_cast %67 : vector<1x8x8xf32> to vector<8x8xf32>
    %cst_50 = arith.constant dense<0.000000e+00> : vector<8x256xf32>
    %69 = tpu.matmul %68, %66, %cst_50 {dimension_numbers = #tpu.dot_dimension_numbers<[1], [0], [0], [1], [0, 0, 1, 1], [], []>} : vector<8x8xf32>, vector<8x256xf32>, vector<8x256xf32> -> vector<8x256xf32>
    %70 = arith.addf %65, %69 : vector<8x256xf32>
    %c239_i32_51 = arith.constant 239 : i32
    %71 = tpu.dynamic_rotate %52 by %c239_i32_51 dim 1 : vector<8x256xf32>, i32 -> vector<8x256xf32>
    %c4_52 = arith.constant 4 : index
    %c0_53 = arith.constant 0 : index
    %c0_54 = arith.constant 0 : index
    %72 = vector.load %arg4[%c4_52, %c0_53, %c0_54] : memref<9x8x8xf32, #tpu.memory_space<vmem>>, vector<1x8x8xf32>
    %73 = vector.shape_cast %72 : vector<1x8x8xf32> to vector<8x8xf32>
    %cst_55 = arith.constant dense<0.000000e+00> : vector<8x256xf32>
    %74 = tpu.matmul %73, %71, %cst_55 {dimension_numbers = #tpu.dot_dimension_numbers<[1], [0], [0], [1], [0, 0, 1, 1], [], []>} : vector<8x8xf32>, vector<8x256xf32>, vector<8x256xf32> -> vector<8x256xf32>
    %75 = arith.addf %70, %74 : vector<8x256xf32>
    %c238_i32_56 = arith.constant 238 : i32
    %76 = tpu.dynamic_rotate %52 by %c238_i32_56 dim 1 : vector<8x256xf32>, i32 -> vector<8x256xf32>
    %c5_57 = arith.constant 5 : index
    %c0_58 = arith.constant 0 : index
    %c0_59 = arith.constant 0 : index
    %77 = vector.load %arg4[%c5_57, %c0_58, %c0_59] : memref<9x8x8xf32, #tpu.memory_space<vmem>>, vector<1x8x8xf32>
    %78 = vector.shape_cast %77 : vector<1x8x8xf32> to vector<8x8xf32>
    %cst_60 = arith.constant dense<0.000000e+00> : vector<8x256xf32>
    %79 = tpu.matmul %78, %76, %cst_60 {dimension_numbers = #tpu.dot_dimension_numbers<[1], [0], [0], [1], [0, 0, 1, 1], [], []>} : vector<8x8xf32>, vector<8x256xf32>, vector<8x256xf32> -> vector<8x256xf32>
    %80 = arith.addf %75, %79 : vector<8x256xf32>
    %c224_i32_61 = arith.constant 224 : i32
    %81 = tpu.dynamic_rotate %52 by %c224_i32_61 dim 1 : vector<8x256xf32>, i32 -> vector<8x256xf32>
    %c6_62 = arith.constant 6 : index
    %c0_63 = arith.constant 0 : index
    %c0_64 = arith.constant 0 : index
    %82 = vector.load %arg4[%c6_62, %c0_63, %c0_64] : memref<9x8x8xf32, #tpu.memory_space<vmem>>, vector<1x8x8xf32>
    %83 = vector.shape_cast %82 : vector<1x8x8xf32> to vector<8x8xf32>
    %cst_65 = arith.constant dense<0.000000e+00> : vector<8x256xf32>
    %84 = tpu.matmul %83, %81, %cst_65 {dimension_numbers = #tpu.dot_dimension_numbers<[1], [0], [0], [1], [0, 0, 1, 1], [], []>} : vector<8x8xf32>, vector<8x256xf32>, vector<8x256xf32> -> vector<8x256xf32>
    %85 = arith.addf %80, %84 : vector<8x256xf32>
    %c223_i32_66 = arith.constant 223 : i32
    %86 = tpu.dynamic_rotate %52 by %c223_i32_66 dim 1 : vector<8x256xf32>, i32 -> vector<8x256xf32>
    %c7_67 = arith.constant 7 : index
    %c0_68 = arith.constant 0 : index
    %c0_69 = arith.constant 0 : index
    %87 = vector.load %arg4[%c7_67, %c0_68, %c0_69] : memref<9x8x8xf32, #tpu.memory_space<vmem>>, vector<1x8x8xf32>
    %88 = vector.shape_cast %87 : vector<1x8x8xf32> to vector<8x8xf32>
    %cst_70 = arith.constant dense<0.000000e+00> : vector<8x256xf32>
    %89 = tpu.matmul %88, %86, %cst_70 {dimension_numbers = #tpu.dot_dimension_numbers<[1], [0], [0], [1], [0, 0, 1, 1], [], []>} : vector<8x8xf32>, vector<8x256xf32>, vector<8x256xf32> -> vector<8x256xf32>
    %90 = arith.addf %85, %89 : vector<8x256xf32>
    %c222_i32_71 = arith.constant 222 : i32
    %91 = tpu.dynamic_rotate %52 by %c222_i32_71 dim 1 : vector<8x256xf32>, i32 -> vector<8x256xf32>
    %c8_72 = arith.constant 8 : index
    %c0_73 = arith.constant 0 : index
    %c0_74 = arith.constant 0 : index
    %92 = vector.load %arg4[%c8_72, %c0_73, %c0_74] : memref<9x8x8xf32, #tpu.memory_space<vmem>>, vector<1x8x8xf32>
    %93 = vector.shape_cast %92 : vector<1x8x8xf32> to vector<8x8xf32>
    %cst_75 = arith.constant dense<0.000000e+00> : vector<8x256xf32>
    %94 = tpu.matmul %93, %91, %cst_75 {dimension_numbers = #tpu.dot_dimension_numbers<[1], [0], [0], [1], [0, 0, 1, 1], [], []>} : vector<8x8xf32>, vector<8x256xf32>, vector<8x256xf32> -> vector<8x256xf32>
    %95 = arith.addf %90, %94 : vector<8x256xf32>
    %c0_76 = arith.constant 0 : index
    %c0_77 = arith.constant 0 : index
    %96 = vector.load %arg5[%c0_76, %c0_77] : memref<8x1xf32, #tpu.memory_space<vmem>>, vector<8x1xf32>
    %97 = vector.broadcast %96 : vector<8x1xf32> to vector<8x256xf32>
    %98 = arith.addf %95, %97 : vector<8x256xf32>
    %99 = arith.index_cast %1 : i32 to index
    %c0_78 = arith.constant 0 : index
    %c0_79 = arith.constant 0 : index
    %100 = vector.load %arg6[%99, %c0_78, %c0_79] : memref<1x8x256xf32, #tpu.memory_space<vmem>>, vector<1x8x256xf32>
    %101 = vector.shape_cast %100 : vector<1x8x256xf32> to vector<8x256xf32>
    %102 = vector.shape_cast %98 : vector<8x256xf32> to vector<1x8x256xf32>
    tpu.vector_store %arg6[%99, %c0_78, %c0_79], %102 {strides = array<i32>} : memref<1x8x256xf32, #tpu.memory_space<vmem>>, vector<1x8x256xf32>,
    %c1_i32_80 = arith.constant 1 : i32
    return
  }
  func.func @transform_0(%arg0: i32) -> (i32, i32, i32) {
    %c0_i32 = arith.constant 0 : i32
    %c0_i32_0 = arith.constant 0 : i32
    %c0_i32_1 = arith.constant 0 : i32
    return %arg0, %c0_i32, %c0_i32_0 : i32, i32, i32
  }
  func.func @transform_1(%arg0: i32) -> (i32, i32, i32) {
    %c0_i32 = arith.constant 0 : i32
    %c0_i32_0 = arith.constant 0 : i32
    %c0_i32_1 = arith.constant 0 : i32
    %c0_i32_2 = arith.constant 0 : i32
    return %c0_i32, %c0_i32_0, %c0_i32_1 : i32, i32, i32
  }
  func.func @transform_2(%arg0: i32) -> (i32, i32) {
    %c0_i32 = arith.constant 0 : i32
    %c0_i32_0 = arith.constant 0 : i32
    %c0_i32_1 = arith.constant 0 : i32
    return %c0_i32, %c0_i32_0 : i32, i32
  }
  func.func @transform_3(%arg0: i32) -> (i32, i32, i32) {
    %c0_i32 = arith.constant 0 : i32
    %c0_i32_0 = arith.constant 0 : i32
    %c0_i32_1 = arith.constant 0 : i32
    %c0_i32_2 = arith.constant 0 : i32
    return %c0_i32, %c0_i32_0, %c0_i32_1 : i32, i32, i32
  }
  func.func @transform_4(%arg0: i32) -> (i32, i32) {
    %c0_i32 = arith.constant 0 : i32
    %c0_i32_0 = arith.constant 0 : i32
    %c0_i32_1 = arith.constant 0 : i32
    return %c0_i32, %c0_i32_0 : i32, i32
  }
  func.func @transform_5(%arg0: i32) -> (i32, i32, i32) {
    %c0_i32 = arith.constant 0 : i32
    %c0_i32_0 = arith.constant 0 : i32
    %c0_i32_1 = arith.constant 0 : i32
    return %arg0, %c0_i32, %c0_i32_0 : i32, i32, i32
  }
}

</mosaic_0001>

<llo_original>
// kernel: block_forward.1
$region0: #{block_forward.1}
  #allocation0 [shape = 'u32[]', space=smem, size = 0x4, offset = 0x4, fixed_abs, tag = 'smem constant byte address 0x4 - core index']
  #allocation1 [shape = 'u32[144,128]{1,0:T(1,128)}', space=vmem, size = 0x12000, scoped, tag = 'internal scratch']
  %s0 = inlined_call_operand.vmem [shape: f32[2,4,256], index: 0, kind: input, shape index: {}]
  %s1 = inlined_call_operand.vmem [shape: f32[9,8,4], index: 1, kind: input, shape index: {}]
  %s2 = inlined_call_operand.vmem [shape: f32[8,1], index: 2, kind: input, shape index: {}]
  %s3 = inlined_call_operand.vmem [shape: f32[9,8,8], index: 3, kind: input, shape index: {}]
  %s4 = inlined_call_operand.vmem [shape: f32[8,1], index: 4, kind: input, shape index: {}]
  %s5 = inlined_call_operand.vmem [shape: f32[2,8,256], index: 5, kind: output, shape index: {}]
  %s6 = sld [smem:[#allocation0]]
  $region53: #{block_forward.1} parent=0
    _
  %s8 = ssub.s32 1, %s6
  %s9 = scalar_select 0, %s8, %s6
  loop: start=0, step=1, limit=4
  $region2: #{block_forward.1} parent=0 // loop_pre_header
    _
  $region3: #{block_forward.1} parent=0 // loop_header
    %s11 = sphi 0, %s15
    %p12 = scmp.ge.s32.totalorder %s11, 4
    %s21 = sphi 0, %s23
    %s24 = sphi 0, %s21
    %s25 = sphi 0, %s24
    %s41 = sphi 0, %s25
    %s45 = sphi 0, %s45
    %s47 = sphi 0, %s45
    %s48 = sphi 0, %s47
    %s62 = sphi 0, %s48
    %s66 = sphi 0, %s66
    %s68 = sphi 0, %s66
    %s69 = sphi 0, %s68
    %s83 = sphi 0, %s69
    %s87 = sphi 0, %s87
    %s89 = sphi 0, %s87
    %s90 = sphi 0, %s89
    %s104 = sphi 0, %s90
    %s108 = sphi 0, %s108
    %s110 = sphi 0, %s108
    %s111 = sphi 0, %s110
    %s125 = sphi 0, %s111
    %s131 = sphi 0, %s133
    %s134 = sphi 0, %s131
    %s135 = sphi 0, %s134
    %s151 = sphi 0, %s135
  $region4: #{block_forward.1} parent=0 // loop_header_branch
    %14 = sbr.rel (%p12) target = $region8
  $region5: #{block_forward.1} parent=0 // loop_body
    %s16 = ssub.s32 %s11, 1
    %s17 = ssub.s32 %s11, 2
    %s18 = sadd.s32 %s11, 1
    %s19 = ssub.s32 %s11, %s18
    %p20 = scmp.eq.s32.totalorder %s19, 0
    %s22 = sadd.s32 %s21, 1
    %s23 = scalar_select %p20, %s21, %s22
    %p26 = pneg %p20
    %p27 = scmp.eq.s32.totalorder %s11, 1
    %p28 = por %p26, %p27
    %p29 = scmp.ne.s32.totalorder %s21, %s24
    %p30 = scmp.eq.s32.totalorder %s11, 0
    %p31 = por %p29, %p30
    %p32 = scmp.ne.s32.totalorder %s21, %s24
    %p33 = scmp.eq.s32.totalorder %s16, 1
    %p34 = por %p32, %p33
    %p35 = scmp.ne.s32.totalorder %s24, %s25
    %p36 = scmp.eq.s32.totalorder %s16, 0
    %p37 = por %p35, %p36
    %p38 = scmp.ne.s32.totalorder %s24, %s25
    %p39 = scmp.eq.s32.totalorder %s17, 1
    %p40 = por %p38, %p39
    %p42 = scmp.ne.s32.totalorder %s25, %s41
    %p43 = scmp.eq.s32.totalorder %s17, 0
    %p44 = por %p42, %p43
    %s46 = sadd.s32 %s45, 1
    %p49 = scmp.eq.s32.totalorder %s11, 1
    %p50 = scmp.ne.s32.totalorder %s45, %s47
    %p51 = scmp.eq.s32.totalorder %s11, 0
    %p52 = por %p50, %p51
    %p53 = scmp.ne.s32.totalorder %s45, %s47
    %p54 = scmp.eq.s32.totalorder %s16, 1
    %p55 = por %p53, %p54
    %p56 = scmp.ne.s32.totalorder %s47, %s48
    %p57 = scmp.eq.s32.totalorder %s16, 0
    %p58 = por %p56, %p57
    %p59 = scmp.ne.s32.totalorder %s47, %s48
    %p60 = scmp.eq.s32.totalorder %s17, 1
    %p61 = por %p59, %p60
    %p63 = scmp.ne.s32.totalorder %s48, %s62
    %p64 = scmp.eq.s32.totalorder %s17, 0
    %p65 = por %p63, %p64
    %s67 = sadd.s32 %s66, 1
    %p70 = scmp.eq.s32.totalorder %s11, 1
    %p71 = scmp.ne.s32.totalorder %s66, %s68
    %p72 = scmp.eq.s32.totalorder %s11, 0
    %p73 = por %p71, %p72
    %p74 = scmp.ne.s32.totalorder %s66, %s68
    %p75 = scmp.eq.s32.totalorder %s16, 1
    %p76 = por %p74, %p75
    %p77 = scmp.ne.s32.totalorder %s68, %s69
    %p78 = scmp.eq.s32.totalorder %s16, 0
    %p79 = por %p77, %p78
    %p80 = scmp.ne.s32.totalorder %s68, %s69
    %p81 = scmp.eq.s32.totalorder %s17, 1
    %p82 = por %p80, %p81
    %p84 = scmp.ne.s32.totalorder %s69, %s83
    %p85 = scmp.eq.s32.totalorder %s17, 0
    %p86 = por %p84, %p85
    %s88 = sadd.s32 %s87, 1
    %p91 = scmp.eq.s32.totalorder %s11, 1
    %p92 = scmp.ne.s32.totalorder %s87, %s89
    %p93 = scmp.eq.s32.totalorder %s11, 0
    %p94 = por %p92, %p93
    %p95 = scmp.ne.s32.totalorder %s87, %s89
    %p96 = scmp.eq.s32.totalorder %s16, 1
    %p97 = por %p95, %p96
    %p98 = scmp.ne.s32.totalorder %s89, %s90
    %p99 = scmp.eq.s32.totalorder %s16, 0
    %p100 = por %p98, %p99
    %p101 = scmp.ne.s32.totalorder %s89, %s90
    %p102 = scmp.eq.s32.totalorder %s17, 1
    %p103 = por %p101, %p102
    %p105 = scmp.ne.s32.totalorder %s90, %s104
    %p106 = scmp.eq.s32.totalorder %s17, 0
    %p107 = por %p105, %p106
    %s109 = sadd.s32 %s108, 1
    %p112 = scmp.eq.s32.totalorder %s11, 1
    %p113 = scmp.ne.s32.totalorder %s108, %s110
    %p114 = scmp.eq.s32.totalorder %s11, 0
    %p115 = por %p113, %p114
    %p116 = scmp.ne.s32.totalorder %s108, %s110
    %p117 = scmp.eq.s32.totalorder %s16, 1
    %p118 = por %p116, %p117
    %p119 = scmp.ne.s32.totalorder %s110, %s111
    %p120 = scmp.eq.s32.totalorder %s16, 0
    %p121 = por %p119, %p120
    %p122 = scmp.ne.s32.totalorder %s110, %s111
    %p123 = scmp.eq.s32.totalorder %s17, 1
    %p124 = por %p122, %p123
    %p126 = scmp.ne.s32.totalorder %s111, %s125
    %p127 = scmp.eq.s32.totalorder %s17, 0
    %p128 = por %p126, %p127
    %s129 = ssub.s32 %s11, %s18
    %p130 = scmp.eq.s32.totalorder %s129, 0
    %s132 = sadd.s32 %s131, 1
    %s133 = scalar_select %p130, %s131, %s132
    %p136 = pneg %p130
    %p137 = scmp.eq.s32.totalorder %s11, 1
    %p138 = por %p136, %p137
    %p139 = scmp.ne.s32.totalorder %s131, %s134
    %p140 = scmp.eq.s32.totalorder %s11, 0
    %p141 = por %p139, %p140
    %p142 = scmp.ne.s32.totalorder %s131, %s134
    %p143 = scmp.eq.s32.totalorder %s16, 1
    %p144 = por %p142, %p143
    %p145 = scmp.ne.s32.totalorder %s134, %s135
    %p146 = scmp.eq.s32.totalorder %s16, 0
    %p147 = por %p145, %p146
    %p148 = scmp.ne.s32.totalorder %s134, %s135
    %p149 = scmp.eq.s32.totalorder %s17, 1
    %p150 = por %p148, %p149
    %p152 = scmp.ne.s32.totalorder %s135, %s151
    %p153 = scmp.eq.s32.totalorder %s17, 0
    %p154 = por %p152, %p153
    %p155 = scmp.le.s32.totalorder 1, %s11
    %p156 = scmp.lt.s32.totalorder %s11, 3
    %p157 = pnand %p155, %p156
    %p158 = pneg %p157
    // Predicated region
    $region9: #{block_forward.1} parent=5 // pred_check
      _
    $region10: #{block_forward.1} parent=5 // pred_check_branch
      %160 = sbr.rel (%p157) target = $region12
    $region11: #{block_forward.1} parent=5 // pred_region
      %s161 = ssub.s32 %s11, 1
      // Predicated region
      $region13: #{block_forward.1} parent=11 // pred_check
        %p162 = pneg %p58
      $region14: #{block_forward.1} parent=11 // pred_check_branch
        %164 = sbr.rel (%p162) target = $region16
      $region15: #{block_forward.1} parent=11 // pred_region
        _
      $region16: #{block_forward.1} parent=11 // pred_fallthru
        _
      // Predicated region
      $region17: #{block_forward.1} parent=11 // pred_check
        %p165 = pneg %p79
      $region18: #{block_forward.1} parent=11 // pred_check_branch
        %167 = sbr.rel (%p165) target = $region20
      $region19: #{block_forward.1} parent=11 // pred_region
        _
      $region20: #{block_forward.1} parent=11 // pred_fallthru
        _
      // Predicated region
      $region21: #{block_forward.1} parent=11 // pred_check
        %p168 = pneg %p100
      $region22: #{block_forward.1} parent=11 // pred_check_branch
        %170 = sbr.rel (%p168) target = $region24
      $region23: #{block_forward.1} parent=11 // pred_region
        _
      $region24: #{block_forward.1} parent=11 // pred_fallthru
        _
      // Predicated region
      $region25: #{block_forward.1} parent=11 // pred_check
        %p171 = pneg %p121
      $region26: #{block_forward.1} parent=11 // pred_check_branch
        %173 = sbr.rel (%p171) target = $region28
      $region27: #{block_forward.1} parent=11 // pred_region
        _
      $region28: #{block_forward.1} parent=11 // pred_fallthru
        _
    $region12: #{block_forward.1} parent=5 // pred_fallthru
      _
    %p174 = scmp.lt.s32.totalorder %s11, 2
    // Predicated region
    $region29: #{block_forward.1} parent=5 // pred_check
      %p175 = pneg %p174
    $region30: #{block_forward.1} parent=5 // pred_check_branch
      %177 = sbr.rel (%p175) target = $region32
    $region31: #{block_forward.1} parent=5 // pred_region
      // Predicated region
      $region33: #{block_forward.1} parent=31 // pred_check
        %p178 = pneg %p31
      $region34: #{block_forward.1} parent=31 // pred_check_branch
        %180 = sbr.rel (%p178) target = $region36
      $region35: #{block_forward.1} parent=31 // pred_region
        %p181 = scmp.lt.s32.totalorder %s11, 1
        %s182 = scalar_select %p181, %s11, 1
        %s183 = smul.addr %s182, 2
        %s184 = smul.addr %s183, 4
        %s185 = scalar_lea.vmem %s0, %s184
      $region36: #{block_forward.1} parent=31 // pred_fallthru
        _
    $region32: #{block_forward.1} parent=5 // pred_fallthru
      _
    %p186 = scmp.le.s32.totalorder 1, %s11
    %p187 = scmp.lt.s32.totalorder %s11, 3
    %p188 = pnand %p186, %p187
    %p189 = pneg %p188
    // Predicated region
    $region37: #{block_forward.1} parent=5 // pred_check
      _
    $region38: #{block_forward.1} parent=5 // pred_check_branch
      %191 = sbr.rel (%p188) target = $region40
    $region39: #{block_forward.1} parent=5 // pred_region
      %s192 = ssub.s32 %s11, 1
      %p193 = scmp.lt.s32.totalorder %s16, 1
      %s194 = scalar_select %p193, %s16, 1
      %s195 = smul.addr %s194, 2
      %s196 = smul.addr %s195, 4
      %s197 = scalar_lea.vmem %s0, %s196
      %p198 = pneg %p37
      %p199 = pneg %p34
      %p200 = pneg %p58
      %p201 = pneg %p55
      %p202 = pneg %p79
      %p203 = pneg %p76
      %p204 = pneg %p100
      %p205 = pneg %p97
      %p206 = pneg %p121
      %p207 = pneg %p118
      %p208 = pneg %p147
      %p209 = pneg %p144
      %p210 = scmp.lt.s32.totalorder %s16, 1
      %s211 = scalar_select %p210, %s16, 1
      %s212 = smul.addr %s211, 2
      %s213 = smul.addr %s212, 8
      %s214 = scalar_lea.vmem %s5, %s213
      %p215 = scmp.lt.s32.totalorder %s16, 1
      %s216 = scalar_select %p215, %s16, 1
      %s217 = smul.addr %s216, 2
      %s218 = smul.addr %s217, 4
      %s219 = scalar_lea.vmem %s0, %s218
      %p220 = scmp.lt.s32.totalorder %s16, 1
      %s221 = scalar_select %p220, %s16, 1
      %s222 = smul.addr %s221, 2
      %s223 = smul.addr %s222, 8
      %s224 = scalar_lea.vmem %s5, %s223
      %v225 = vld [vmem:[%s219] sm:$0xff]
      %v226 = vld [vmem:[%s1] sm:$0xff]
      %v228 = vcombine.high %v225, %v225
      %230 = vrot.lane.b32.xlu0 %v225, 127
      %v231 = vpop.permute.xlu0 %230
      %232 = vrot.lane.b32.xlu0 %v228, 127
      %v233 = vpop.permute.xlu0 %232
      %v234 = vlaneseq
      %v235 = vand.u32 %v234, 127
      %vm236 = vcmp.lt.s32.totalorder %v235, 127
      %v237 = vsel %vm236, %v231, %v233
      %v238 = vsel %vm236, %v233, %v231
      %s239 = scalar_lea.vmem %s1, 8
      %v240 = vld [vmem:[%s239] sm:$0xff]
      %vm241 = vcmask 31744
      %v243 = vsel %vm241, %v240, 0
      %vm245 = vcmask 1043456
      %v247 = vsel %vm245, %v237, 0
      %v250 = vsel %vm245, %v238, 0
      %252 = vmatprep.subr.mxu0 %v250
      %253 = vmatpush1.msra.mxu0 %v247
      %254 = vmatprep.subr.mxu0 0.0
      %255 = vmatpush1.msra.mxu0 0.0
      %256 = vmatprep.subr.mxu0 0.0
      %257 = vmatpush1.msra.mxu0 0.0
      %258 = vmatprep.subr.mxu0 0.0
      %259 = vmatpush1.msra.mxu0 0.0
      %260 = vmatprep.subr.mxu0 0.0
      %261 = vmatpush1.msra.mxu0 0.0
      %262 = vmatprep.subr.mxu0 0.0
      %263 = vmatpush1.msra.mxu0 0.0
      %264 = vmatprep.subr.mxu0 0.0
      %265 = vmatpush1.msra.mxu0 0.0
      %266 = vmatprep.subr.mxu0 0.0
      %267 = vmatpush1.msra.mxu0 0.0
      %268 = vmatprep.subr.mxu0 0.0
      %269 = vmatpush1.msra.mxu0 0.0
      %270 = vmatprep.subr.mxu0 0.0
      %271 = vmatpush1.msra.mxu0 0.0
      %272 = vmatprep.subr.mxu0 0.0
      %273 = vmatpush1.msra.mxu0 0.0
      %274 = vmatprep.subr.mxu0 0.0
      %275 = vmatpush1.msra.mxu0 0.0
      %276 = vmatprep.subr.mxu0 0.0
      %277 = vmatpush1.msra.mxu0 0.0
      %278 = vmatprep.subr.mxu0 0.0
      %279 = vmatpush1.msra.mxu0 0.0
      %280 = vmatprep.subr.mxu0 0.0
      %281 = vmatpush1.msra.mxu0 0.0
      %282 = vmatprep.subr.mxu0 0.0
      %283 = vmatpush1.msra.mxu0 0.0
      %284 = vmatprep.subr.mxu0 0.0
      %285 = vmatpush1.msra.mxu0 0.0
      %286 = vmatprep.subr.mxu0 0.0
      %287 = vmatpush1.msra.mxu0 0.0
      %288 = vmatprep.subr.mxu0 0.0
      %289 = vmatpush1.msra.mxu0 0.0
      %290 = vmatprep.subr.mxu0 0.0
      %291 = vmatpush1.msra.mxu0 0.0
      %292 = vmatprep.subr.mxu0 0.0
      %293 = vmatpush1.msra.mxu0 0.0
      %294 = vmatprep.subr.mxu0 0.0
      %295 = vmatpush1.msra.mxu0 0.0
      %296 = vmatprep.subr.mxu0 0.0
      %297 = vmatpush1.msra.mxu0 0.0
      %298 = vmatprep.subr.mxu0 0.0
      %299 = vmatpush1.msra.mxu0 0.0
      %300 = vmatprep.subr.mxu0 0.0
      %301 = vmatpush1.msra.mxu0 0.0
      %302 = vmatprep.subr.mxu0 0.0
      %303 = vmatpush1.msra.mxu0 0.0
      %304 = vmatprep.subr.mxu0 0.0
      %305 = vmatpush1.msra.mxu0 0.0
      %306 = vmatprep.subr.mxu0 0.0
      %307 = vmatpush1.msra.mxu0 0.0
      %308 = vmatprep.subr.mxu0 0.0
      %309 = vmatpush1.msra.mxu0 0.0
      %310 = vmatprep.subr.mxu0 0.0
      %311 = vmatpush1.msra.mxu0 0.0
      %312 = vmatprep.subr.mxu0 0.0
      %313 = vmatpush1.msra.mxu0 0.0
      %314 = vmatprep.subr.mxu0 0.0
      %315 = vmatpush1.msra.mxu0 0.0
      %316 = vmatprep.mubr.f32.mxu0 0.0
      %317 = vmatmul.mubr.f32.gmra.mrb[0].mxu0 %v243
      %v318 = vpop.f32.mrb[0].mxu0
      %v319 = vadd.f32 0.0, %v318
      %v320 = vpop.f32.mrb[0].mxu0
      %v321 = vadd.f32 0.0, %v320
      %322 = vdwg.mxu0
      %v324 = vsel %vm241, %v226, 0
      %v326 = vsel %vm245, %v225, 0
      %v328 = vsel %vm245, %v228, 0
      %330 = vmatprep.subr.mxu0 %v328
      %331 = vmatpush1.msra.mxu0 %v326
      %332 = vmatprep.subr.mxu0 0.0
      %333 = vmatpush1.msra.mxu0 0.0
      %334 = vmatprep.subr.mxu0 0.0
      %335 = vmatpush1.msra.mxu0 0.0
      %336 = vmatprep.subr.mxu0 0.0
      %337 = vmatpush1.msra.mxu0 0.0
      %338 = vmatprep.subr.mxu0 0.0
      %339 = vmatpush1.msra.mxu0 0.0
      %340 = vmatprep.subr.mxu0 0.0
      %341 = vmatpush1.msra.mxu0 0.0
      %342 = vmatprep.subr.mxu0 0.0
      %343 = vmatpush1.msra.mxu0 0.0
      %344 = vmatprep.subr.mxu0 0.0
      %345 = vmatpush1.msra.mxu0 0.0
      %346 = vmatprep.subr.mxu0 0.0
      %347 = vmatpush1.msra.mxu0 0.0
      %348 = vmatprep.subr.mxu0 0.0
      %349 = vmatpush1.msra.mxu0 0.0
      %350 = vmatprep.subr.mxu0 0.0
      %351 = vmatpush1.msra.mxu0 0.0
      %352 = vmatprep.subr.mxu0 0.0
      %353 = vmatpush1.msra.mxu0 0.0
      %354 = vmatprep.subr.mxu0 0.0
      %355 = vmatpush1.msra.mxu0 0.0
      %356 = vmatprep.subr.mxu0 0.0
      %357 = vmatpush1.msra.mxu0 0.0
      %358 = vmatprep.subr.mxu0 0.0
      %359 = vmatpush1.msra.mxu0 0.0
      %360 = vmatprep.subr.mxu0 0.0
      %361 = vmatpush1.msra.mxu0 0.0
      %362 = vmatprep.subr.mxu0 0.0
      %363 = vmatpush1.msra.mxu0 0.0
      %364 = vmatprep.subr.mxu0 0.0
      %365 = vmatpush1.msra.mxu0 0.0
      %366 = vmatprep.subr.mxu0 0.0
      %367 = vmatpush1.msra.mxu0 0.0
      %368 = vmatprep.subr.mxu0 0.0
      %369 = vmatpush1.msra.mxu0 0.0
      %370 = vmatprep.subr.mxu0 0.0
      %371 = vmatpush1.msra.mxu0 0.0
      %372 = vmatprep.subr.mxu0 0.0
      %373 = vmatpush1.msra.mxu0 0.0
      %374 = vmatprep.subr.mxu0 0.0
      %375 = vmatpush1.msra.mxu0 0.0
      %376 = vmatprep.subr.mxu0 0.0
      %377 = vmatpush1.msra.mxu0 0.0
      %378 = vmatprep.subr.mxu0 0.0
      %379 = vmatpush1.msra.mxu0 0.0
      %380 = vmatprep.subr.mxu0 0.0
      %381 = vmatpush1.msra.mxu0 0.0
      %382 = vmatprep.subr.mxu0 0.0
      %383 = vmatpush1.msra.mxu0 0.0
      %384 = vmatprep.subr.mxu0 0.0
      %385 = vmatpush1.msra.mxu0 0.0
      %386 = vmatprep.subr.mxu0 0.0
      %387 = vmatpush1.msra.mxu0 0.0
      %388 = vmatprep.subr.mxu0 0.0
      %389 = vmatpush1.msra.mxu0 0.0
      %390 = vmatprep.subr.mxu0 0.0
      %391 = vmatpush1.msra.mxu0 0.0
      %392 = vmatprep.subr.mxu0 0.0
      %393 = vmatpush1.msra.mxu0 0.0
      %394 = vmatprep.mubr.f32.mxu0 0.0
      %395 = vmatmul.mubr.f32.gmra.mrb[0].mxu0 %v324
      %v396 = vpop.f32.mrb[0].mxu0
      %v397 = vadd.f32 %v319, %v396
      %v398 = vpop.f32.mrb[0].mxu0
      %v399 = vadd.f32 %v321, %v398
      %400 = vdwg.mxu0
      %401 = vrot.lane.b32.xlu0 %v225, 126
      %v402 = vpop.permute.xlu0 %401
      %403 = vrot.lane.b32.xlu0 %v228, 126
      %v404 = vpop.permute.xlu0 %403
      %vm405 = vcmp.lt.s32.totalorder %v235, 126
      %v406 = vsel %vm405, %v402, %v404
      %v407 = vsel %vm405, %v404, %v402
      %s408 = scalar_lea.vmem %s1, 16
      %v409 = vld [vmem:[%s408] sm:$0xff]
      %v411 = vsel %vm241, %v409, 0
      %v414 = vsel %vm245, %v406, 0
      %v417 = vsel %vm245, %v407, 0
      %419 = vmatprep.subr.mxu0 %v417
      %420 = vmatpush1.msra.mxu0 %v414
      %421 = vmatprep.subr.mxu0 0.0
      %422 = vmatpush1.msra.mxu0 0.0
      %423 = vmatprep.subr.mxu0 0.0
      %424 = vmatpush1.msra.mxu0 0.0
      %425 = vmatprep.subr.mxu0 0.0
      %426 = vmatpush1.msra.mxu0 0.0
      %427 = vmatprep.subr.mxu0 0.0
      %428 = vmatpush1.msra.mxu0 0.0
      %429 = vmatprep.subr.mxu0 0.0
      %430 = vmatpush1.msra.mxu0 0.0
      %431 = vmatprep.subr.mxu0 0.0
      %432 = vmatpush1.msra.mxu0 0.0
      %433 = vmatprep.subr.mxu0 0.0
      %434 = vmatpush1.msra.mxu0 0.0
      %435 = vmatprep.subr.mxu0 0.0
      %436 = vmatpush1.msra.mxu0 0.0
      %437 = vmatprep.subr.mxu0 0.0
      %438 = vmatpush1.msra.mxu0 0.0
      %439 = vmatprep.subr.mxu0 0.0
      %440 = vmatpush1.msra.mxu0 0.0
      %441 = vmatprep.subr.mxu0 0.0
      %442 = vmatpush1.msra.mxu0 0.0
      %443 = vmatprep.subr.mxu0 0.0
      %444 = vmatpush1.msra.mxu0 0.0
      %445 = vmatprep.subr.mxu0 0.0
      %446 = vmatpush1.msra.mxu0 0.0
      %447 = vmatprep.subr.mxu0 0.0
      %448 = vmatpush1.msra.mxu0 0.0
      %449 = vmatprep.subr.mxu0 0.0
      %450 = vmatpush1.msra.mxu0 0.0
      %451 = vmatprep.subr.mxu0 0.0
      %452 = vmatpush1.msra.mxu0 0.0
      %453 = vmatprep.subr.mxu0 0.0
      %454 = vmatpush1.msra.mxu0 0.0
      %455 = vmatprep.subr.mxu0 0.0
      %456 = vmatpush1.msra.mxu0 0.0
      %457 = vmatprep.subr.mxu0 0.0
      %458 = vmatpush1.msra.mxu0 0.0
      %459 = vmatprep.subr.mxu0 0.0
      %460 = vmatpush1.msra.mxu0 0.0
      %461 = vmatprep.subr.mxu0 0.0
      %462 = vmatpush1.msra.mxu0 0.0
      %463 = vmatprep.subr.mxu0 0.0
      %464 = vmatpush1.msra.mxu0 0.0
      %465 = vmatprep.subr.mxu0 0.0
      %466 = vmatpush1.msra.mxu0 0.0
      %467 = vmatprep.subr.mxu0 0.0
      %468 = vmatpush1.msra.mxu0 0.0
      %469 = vmatprep.subr.mxu0 0.0
      %470 = vmatpush1.msra.mxu0 0.0
      %471 = vmatprep.subr.mxu0 0.0
      %472 = vmatpush1.msra.mxu0 0.0
      %473 = vmatprep.subr.mxu0 0.0
      %474 = vmatpush1.msra.mxu0 0.0
      %475 = vmatprep.subr.mxu0 0.0
      %476 = vmatpush1.msra.mxu0 0.0
      %477 = vmatprep.subr.mxu0 0.0
      %478 = vmatpush1.msra.mxu0 0.0
      %479 = vmatprep.subr.mxu0 0.0
      %480 = vmatpush1.msra.mxu0 0.0
      %481 = vmatprep.subr.mxu0 0.0
      %482 = vmatpush1.msra.mxu0 0.0
      %483 = vmatprep.mubr.f32.mxu0 0.0
      %484 = vmatmul.mubr.f32.gmra.mrb[0].mxu0 %v411
      %v485 = vpop.f32.mrb[0].mxu0
      %v486 = vadd.f32 0.0, %v485
      %v487 = vpop.f32.mrb[0].mxu0
      %v488 = vadd.f32 0.0, %v487
      %489 = vdwg.mxu0
      %v490 = vadd.f32 %v397, %v486
      %v491 = vadd.f32 %v399, %v488
      %492 = vrot.lane.b32.xlu0 %v225, 112
      %v493 = vpop.permute.xlu0 %492
      %494 = vrot.lane.b32.xlu0 %v228, 112
      %v495 = vpop.permute.xlu0 %494
      %vm496 = vcmp.lt.s32.totalorder %v235, 112
      %v497 = vsel %vm496, %v493, %v495
      %v498 = vsel %vm496, %v495, %v493
      %s499 = scalar_lea.vmem %s1, 24
      %v500 = vld [vmem:[%s499] sm:$0xff]
      %v502 = vsel %vm241, %v500, 0
      %v505 = vsel %vm245, %v497, 0
      %v508 = vsel %vm245, %v498, 0
      %510 = vmatprep.subr.mxu0 %v508
      %511 = vmatpush1.msra.mxu0 %v505
      %512 = vmatprep.subr.mxu0 0.0
      %513 = vmatpush1.msra.mxu0 0.0
      %514 = vmatprep.subr.mxu0 0.0
      %515 = vmatpush1.msra.mxu0 0.0
      %516 = vmatprep.subr.mxu0 0.0
      %517 = vmatpush1.msra.mxu0 0.0
      %518 = vmatprep.subr.mxu0 0.0
      %519 = vmatpush1.msra.mxu0 0.0
      %520 = vmatprep.subr.mxu0 0.0
      %521 = vmatpush1.msra.mxu0 0.0
      %522 = vmatprep.subr.mxu0 0.0
      %523 = vmatpush1.msra.mxu0 0.0
      %524 = vmatprep.subr.mxu0 0.0
      %525 = vmatpush1.msra.mxu0 0.0
      %526 = vmatprep.subr.mxu0 0.0
      %527 = vmatpush1.msra.mxu0 0.0
      %528 = vmatprep.subr.mxu0 0.0
      %529 = vmatpush1.msra.mxu0 0.0
      %530 = vmatprep.subr.mxu0 0.0
      %531 = vmatpush1.msra.mxu0 0.0
      %532 = vmatprep.subr.mxu0 0.0
      %533 = vmatpush1.msra.mxu0 0.0
      %534 = vmatprep.subr.mxu0 0.0
      %535 = vmatpush1.msra.mxu0 0.0
      %536 = vmatprep.subr.mxu0 0.0
      %537 = vmatpush1.msra.mxu0 0.0
      %538 = vmatprep.subr.mxu0 0.0
      %539 = vmatpush1.msra.mxu0 0.0
      %540 = vmatprep.subr.mxu0 0.0
      %541 = vmatpush1.msra.mxu0 0.0
      %542 = vmatprep.subr.mxu0 0.0
      %543 = vmatpush1.msra.mxu0 0.0
      %544 = vmatprep.subr.mxu0 0.0
      %545 = vmatpush1.msra.mxu0 0.0
      %546 = vmatprep.subr.mxu0 0.0
      %547 = vmatpush1.msra.mxu0 0.0
      %548 = vmatprep.subr.mxu0 0.0
      %549 = vmatpush1.msra.mxu0 0.0
      %550 = vmatprep.subr.mxu0 0.0
      %551 = vmatpush1.msra.mxu0 0.0
      %552 = vmatprep.subr.mxu0 0.0
      %553 = vmatpush1.msra.mxu0 0.0
      %554 = vmatprep.subr.mxu0 0.0
      %555 = vmatpush1.msra.mxu0 0.0
      %556 = vmatprep.subr.mxu0 0.0
      %557 = vmatpush1.msra.mxu0 0.0
      %558 = vmatprep.subr.mxu0 0.0
      %559 = vmatpush1.msra.mxu0 0.0
      %560 = vmatprep.subr.mxu0 0.0
      %561 = vmatpush1.msra.mxu0 0.0
      %562 = vmatprep.subr.mxu0 0.0
      %563 = vmatpush1.msra.mxu0 0.0
      %564 = vmatprep.subr.mxu0 0.0
      %565 = vmatpush1.msra.mxu0 0.0
      %566 = vmatprep.subr.mxu0 0.0
      %567 = vmatpush1.msra.mxu0 0.0
      %568 = vmatprep.subr.mxu0 0.0
      %569 = vmatpush1.msra.mxu0 0.0
      %570 = vmatprep.subr.mxu0 0.0
      %571 = vmatpush1.msra.mxu0 0.0
      %572 = vmatprep.subr.mxu0 0.0
      %573 = vmatpush1.msra.mxu0 0.0
      %574 = vmatprep.mubr.f32.mxu0 0.0
      %575 = vmatmul.mubr.f32.gmra.mrb[0].mxu0 %v502
      %v576 = vpop.f32.mrb[0].mxu0
      %v577 = vadd.f32 0.0, %v576
      %v578 = vpop.f32.mrb[0].mxu0
      %v579 = vadd.f32 0.0, %v578
      %580 = vdwg.mxu0
      %v581 = vadd.f32 %v490, %v577
      %v582 = vadd.f32 %v491, %v579
      %583 = vrot.lane.b32.xlu0 %v225, 111
      %v584 = vpop.permute.xlu0 %583
      %585 = vrot.lane.b32.xlu0 %v228, 111
      %v586 = vpop.permute.xlu0 %585
      %vm587 = vcmp.lt.s32.totalorder %v235, 111
      %v588 = vsel %vm587, %v584, %v586
      %v589 = vsel %vm587, %v586, %v584
      %s590 = scalar_lea.vmem %s1, 32
      %v591 = vld [vmem:[%s590] sm:$0xff]
      %v593 = vsel %vm241, %v591, 0
      %v596 = vsel %vm245, %v588, 0
      %v599 = vsel %vm245, %v589, 0
      %601 = vmatprep.subr.mxu0 %v599
      %602 = vmatpush1.msra.mxu0 %v596
      %603 = vmatprep.subr.mxu0 0.0
      %604 = vmatpush1.msra.mxu0 0.0
      %605 = vmatprep.subr.mxu0 0.0
      %606 = vmatpush1.msra.mxu0 0.0
      %607 = vmatprep.subr.mxu0 0.0
      %608 = vmatpush1.msra.mxu0 0.0
      %609 = vmatprep.subr.mxu0 0.0
      %610 = vmatpush1.msra.mxu0 0.0
      %611 = vmatprep.subr.mxu0 0.0
      %612 = vmatpush1.msra.mxu0 0.0
      %613 = vmatprep.subr.mxu0 0.0
      %614 = vmatpush1.msra.mxu0 0.0
      %615 = vmatprep.subr.mxu0 0.0
      %616 = vmatpush1.msra.mxu0 0.0
      %617 = vmatprep.subr.mxu0 0.0
      %618 = vmatpush1.msra.mxu0 0.0
      %619 = vmatprep.subr.mxu0 0.0
      %620 = vmatpush1.msra.mxu0 0.0
      %621 = vmatprep.subr.mxu0 0.0
      %622 = vmatpush1.msra.mxu0 0.0
      %623 = vmatprep.subr.mxu0 0.0
      %624 = vmatpush1.msra.mxu0 0.0
      %625 = vmatprep.subr.mxu0 0.0
      %626 = vmatpush1.msra.mxu0 0.0
      %627 = vmatprep.subr.mxu0 0.0
      %628 = vmatpush1.msra.mxu0 0.0
      %629 = vmatprep.subr.mxu0 0.0
      %630 = vmatpush1.msra.mxu0 0.0
      %631 = vmatprep.subr.mxu0 0.0
      %632 = vmatpush1.msra.mxu0 0.0
      %633 = vmatprep.subr.mxu0 0.0
      %634 = vmatpush1.msra.mxu0 0.0
      %635 = vmatprep.subr.mxu0 0.0
      %636 = vmatpush1.msra.mxu0 0.0
      %637 = vmatprep.subr.mxu0 0.0
      %638 = vmatpush1.msra.mxu0 0.0
      %639 = vmatprep.subr.mxu0 0.0
      %640 = vmatpush1.msra.mxu0 0.0
      %641 = vmatprep.subr.mxu0 0.0
      %642 = vmatpush1.msra.mxu0 0.0
      %643 = vmatprep.subr.mxu0 0.0
      %644 = vmatpush1.msra.mxu0 0.0
      %645 = vmatprep.subr.mxu0 0.0
      %646 = vmatpush1.msra.mxu0 0.0
      %647 = vmatprep.subr.mxu0 0.0
      %648 = vmatpush1.msra.mxu0 0.0
      %649 = vmatprep.subr.mxu0 0.0
      %650 = vmatpush1.msra.mxu0 0.0
      %651 = vmatprep.subr.mxu0 0.0
      %652 = vmatpush1.msra.mxu0 0.0
      %653 = vmatprep.subr.mxu0 0.0
      %654 = vmatpush1.msra.mxu0 0.0
      %655 = vmatprep.subr.mxu0 0.0
      %656 = vmatpush1.msra.mxu0 0.0
      %657 = vmatprep.subr.mxu0 0.0
      %658 = vmatpush1.msra.mxu0 0.0
      %659 = vmatprep.subr.mxu0 0.0
      %660 = vmatpush1.msra.mxu0 0.0
      %661 = vmatprep.subr.mxu0 0.0
      %662 = vmatpush1.msra.mxu0 0.0
      %663 = vmatprep.subr.mxu0 0.0
      %664 = vmatpush1.msra.mxu0 0.0
      %665 = vmatprep.mubr.f32.mxu0 0.0
      %666 = vmatmul.mubr.f32.gmra.mrb[0].mxu0 %v593
      %v667 = vpop.f32.mrb[0].mxu0
      %v668 = vadd.f32 0.0, %v667
      %v669 = vpop.f32.mrb[0].mxu0
      %v670 = vadd.f32 0.0, %v669
      %671 = vdwg.mxu0
      %v672 = vadd.f32 %v581, %v668
      %v673 = vadd.f32 %v582, %v670
      %674 = vrot.lane.b32.xlu0 %v225, 110
      %v675 = vpop.permute.xlu0 %674
      %676 = vrot.lane.b32.xlu0 %v228, 110
      %v677 = vpop.permute.xlu0 %676
      %vm678 = vcmp.lt.s32.totalorder %v235, 110
      %v679 = vsel %vm678, %v675, %v677
      %v680 = vsel %vm678, %v677, %v675
      %s681 = scalar_lea.vmem %s1, 40
      %v682 = vld [vmem:[%s681] sm:$0xff]
      %v684 = vsel %vm241, %v682, 0
      %v687 = vsel %vm245, %v679, 0
      %v690 = vsel %vm245, %v680, 0
      %692 = vmatprep.subr.mxu0 %v690
      %693 = vmatpush1.msra.mxu0 %v687
      %694 = vmatprep.subr.mxu0 0.0
      %695 = vmatpush1.msra.mxu0 0.0
      %696 = vmatprep.subr.mxu0 0.0
      %697 = vmatpush1.msra.mxu0 0.0
      %698 = vmatprep.subr.mxu0 0.0
      %699 = vmatpush1.msra.mxu0 0.0
      %700 = vmatprep.subr.mxu0 0.0
      %701 = vmatpush1.msra.mxu0 0.0
      %702 = vmatprep.subr.mxu0 0.0
      %703 = vmatpush1.msra.mxu0 0.0
      %704 = vmatprep.subr.mxu0 0.0
      %705 = vmatpush1.msra.mxu0 0.0
      %706 = vmatprep.subr.mxu0 0.0
      %707 = vmatpush1.msra.mxu0 0.0
      %708 = vmatprep.subr.mxu0 0.0
      %709 = vmatpush1.msra.mxu0 0.0
      %710 = vmatprep.subr.mxu0 0.0
      %711 = vmatpush1.msra.mxu0 0.0
      %712 = vmatprep.subr.mxu0 0.0
      %713 = vmatpush1.msra.mxu0 0.0
      %714 = vmatprep.subr.mxu0 0.0
      %715 = vmatpush1.msra.mxu0 0.0
      %716 = vmatprep.subr.mxu0 0.0
      %717 = vmatpush1.msra.mxu0 0.0
      %718 = vmatprep.subr.mxu0 0.0
      %719 = vmatpush1.msra.mxu0 0.0
      %720 = vmatprep.subr.mxu0 0.0
      %721 = vmatpush1.msra.mxu0 0.0
      %722 = vmatprep.subr.mxu0 0.0
      %723 = vmatpush1.msra.mxu0 0.0
      %724 = vmatprep.subr.mxu0 0.0
      %725 = vmatpush1.msra.mxu0 0.0
      %726 = vmatprep.subr.mxu0 0.0
      %727 = vmatpush1.msra.mxu0 0.0
      %728 = vmatprep.subr.mxu0 0.0
      %729 = vmatpush1.msra.mxu0 0.0
      %730 = vmatprep.subr.mxu0 0.0
      %731 = vmatpush1.msra.mxu0 0.0
      %732 = vmatprep.subr.mxu0 0.0
      %733 = vmatpush1.msra.mxu0 0.0
      %734 = vmatprep.subr.mxu0 0.0
      %735 = vmatpush1.msra.mxu0 0.0
      %736 = vmatprep.subr.mxu0 0.0
      %737 = vmatpush1.msra.mxu0 0.0
      %738 = vmatprep.subr.mxu0 0.0
      %739 = vmatpush1.msra.mxu0 0.0
      %740 = vmatprep.subr.mxu0 0.0
      %741 = vmatpush1.msra.mxu0 0.0
      %742 = vmatprep.subr.mxu0 0.0
      %743 = vmatpush1.msra.mxu0 0.0
      %744 = vmatprep.subr.mxu0 0.0
      %745 = vmatpush1.msra.mxu0 0.0
      %746 = vmatprep.subr.mxu0 0.0
      %747 = vmatpush1.msra.mxu0 0.0
      %748 = vmatprep.subr.mxu0 0.0
      %749 = vmatpush1.msra.mxu0 0.0
      %750 = vmatprep.subr.mxu0 0.0
      %751 = vmatpush1.msra.mxu0 0.0
      %752 = vmatprep.subr.mxu0 0.0
      %753 = vmatpush1.msra.mxu0 0.0
      %754 = vmatprep.subr.mxu0 0.0
      %755 = vmatpush1.msra.mxu0 0.0
      %756 = vmatprep.mubr.f32.mxu0 0.0
      %757 = vmatmul.mubr.f32.gmra.mrb[0].mxu0 %v684
      %v758 = vpop.f32.mrb[0].mxu0
      %v759 = vadd.f32 0.0, %v758
      %v760 = vpop.f32.mrb[0].mxu0
      %v761 = vadd.f32 0.0, %v760
      %762 = vdwg.mxu0
      %v763 = vadd.f32 %v672, %v759
      %v764 = vadd.f32 %v673, %v761
      %765 = vrot.lane.b32.xlu0 %v225, 96
      %v766 = vpop.permute.xlu0 %765
      %767 = vrot.lane.b32.xlu0 %v228, 96
      %v768 = vpop.permute.xlu0 %767
      %vm769 = vcmp.lt.s32.totalorder %v235, 96
      %v770 = vsel %vm769, %v766, %v768
      %v771 = vsel %vm769, %v768, %v766
      %s772 = scalar_lea.vmem %s1, 48
      %v773 = vld [vmem:[%s772] sm:$0xff]
      %v775 = vsel %vm241, %v773, 0
      %v778 = vsel %vm245, %v770, 0
      %v781 = vsel %vm245, %v771, 0
      %783 = vmatprep.subr.mxu0 %v781
      %784 = vmatpush1.msra.mxu0 %v778
      %785 = vmatprep.subr.mxu0 0.0
      %786 = vmatpush1.msra.mxu0 0.0
      %787 = vmatprep.subr.mxu0 0.0
      %788 = vmatpush1.msra.mxu0 0.0
      %789 = vmatprep.subr.mxu0 0.0
      %790 = vmatpush1.msra.mxu0 0.0
      %791 = vmatprep.subr.mxu0 0.0
      %792 = vmatpush1.msra.mxu0 0.0
      %793 = vmatprep.subr.mxu0 0.0
      %794 = vmatpush1.msra.mxu0 0.0
      %795 = vmatprep.subr.mxu0 0.0
      %796 = vmatpush1.msra.mxu0 0.0
      %797 = vmatprep.subr.mxu0 0.0
      %798 = vmatpush1.msra.mxu0 0.0
      %799 = vmatprep.subr.mxu0 0.0
      %800 = vmatpush1.msra.mxu0 0.0
      %801 = vmatprep.subr.mxu0 0.0
      %802 = vmatpush1.msra.mxu0 0.0
      %803 = vmatprep.subr.mxu0 0.0
      %804 = vmatpush1.msra.mxu0 0.0
      %805 = vmatprep.subr.mxu0 0.0
      %806 = vmatpush1.msra.mxu0 0.0
      %807 = vmatprep.subr.mxu0 0.0
      %808 = vmatpush1.msra.mxu0 0.0
      %809 = vmatprep.subr.mxu0 0.0
      %810 = vmatpush1.msra.mxu0 0.0
      %811 = vmatprep.subr.mxu0 0.0
      %812 = vmatpush1.msra.mxu0 0.0
      %813 = vmatprep.subr.mxu0 0.0
      %814 = vmatpush1.msra.mxu0 0.0
      %815 = vmatprep.subr.mxu0 0.0
      %816 = vmatpush1.msra.mxu0 0.0
      %817 = vmatprep.subr.mxu0 0.0
      %818 = vmatpush1.msra.mxu0 0.0
      %819 = vmatprep.subr.mxu0 0.0
      %820 = vmatpush1.msra.mxu0 0.0
      %821 = vmatprep.subr.mxu0 0.0
      %822 = vmatpush1.msra.mxu0 0.0
      %823 = vmatprep.subr.mxu0 0.0
      %824 = vmatpush1.msra.mxu0 0.0
      %825 = vmatprep.subr.mxu0 0.0
      %826 = vmatpush1.msra.mxu0 0.0
      %827 = vmatprep.subr.mxu0 0.0
      %828 = vmatpush1.msra.mxu0 0.0
      %829 = vmatprep.subr.mxu0 0.0
      %830 = vmatpush1.msra.mxu0 0.0
      %831 = vmatprep.subr.mxu0 0.0
      %832 = vmatpush1.msra.mxu0 0.0
      %833 = vmatprep.subr.mxu0 0.0
      %834 = vmatpush1.msra.mxu0 0.0
      %835 = vmatprep.subr.mxu0 0.0
      %836 = vmatpush1.msra.mxu0 0.0
      %837 = vmatprep.subr.mxu0 0.0
      %838 = vmatpush1.msra.mxu0 0.0
      %839 = vmatprep.subr.mxu0 0.0
      %840 = vmatpush1.msra.mxu0 0.0
      %841 = vmatprep.subr.mxu0 0.0
      %842 = vmatpush1.msra.mxu0 0.0
      %843 = vmatprep.subr.mxu0 0.0
      %844 = vmatpush1.msra.mxu0 0.0
      %845 = vmatprep.subr.mxu0 0.0
      %846 = vmatpush1.msra.mxu0 0.0
      %847 = vmatprep.mubr.f32.mxu0 0.0
      %848 = vmatmul.mubr.f32.gmra.mrb[0].mxu0 %v775
      %v849 = vpop.f32.mrb[0].mxu0
      %v850 = vadd.f32 0.0, %v849
      %v851 = vpop.f32.mrb[0].mxu0
      %v852 = vadd.f32 0.0, %v851
      %853 = vdwg.mxu0
      %v854 = vadd.f32 %v763, %v850
      %v855 = vadd.f32 %v764, %v852
      %856 = vrot.lane.b32.xlu0 %v225, 95
      %v857 = vpop.permute.xlu0 %856
      %858 = vrot.lane.b32.xlu0 %v228, 95
      %v859 = vpop.permute.xlu0 %858
      %vm860 = vcmp.lt.s32.totalorder %v235, 95
      %v861 = vsel %vm860, %v857, %v859
      %v862 = vsel %vm860, %v859, %v857
      %s863 = scalar_lea.vmem %s1, 56
      %v864 = vld [vmem:[%s863] sm:$0xff]
      %v866 = vsel %vm241, %v864, 0
      %v869 = vsel %vm245, %v861, 0
      %v872 = vsel %vm245, %v862, 0
      %874 = vmatprep.subr.mxu0 %v872
      %875 = vmatpush1.msra.mxu0 %v869
      %876 = vmatprep.subr.mxu0 0.0
      %877 = vmatpush1.msra.mxu0 0.0
      %878 = vmatprep.subr.mxu0 0.0
      %879 = vmatpush1.msra.mxu0 0.0
      %880 = vmatprep.subr.mxu0 0.0
      %881 = vmatpush1.msra.mxu0 0.0
      %882 = vmatprep.subr.mxu0 0.0
      %883 = vmatpush1.msra.mxu0 0.0
      %884 = vmatprep.subr.mxu0 0.0
      %885 = vmatpush1.msra.mxu0 0.0
      %886 = vmatprep.subr.mxu0 0.0
      %887 = vmatpush1.msra.mxu0 0.0
      %888 = vmatprep.subr.mxu0 0.0
      %889 = vmatpush1.msra.mxu0 0.0
      %890 = vmatprep.subr.mxu0 0.0
      %891 = vmatpush1.msra.mxu0 0.0
      %892 = vmatprep.subr.mxu0 0.0
      %893 = vmatpush1.msra.mxu0 0.0
      %894 = vmatprep.subr.mxu0 0.0
      %895 = vmatpush1.msra.mxu0 0.0
      %896 = vmatprep.subr.mxu0 0.0
      %897 = vmatpush1.msra.mxu0 0.0
      %898 = vmatprep.subr.mxu0 0.0
      %899 = vmatpush1.msra.mxu0 0.0
      %900 = vmatprep.subr.mxu0 0.0
      %901 = vmatpush1.msra.mxu0 0.0
      %902 = vmatprep.subr.mxu0 0.0
      %903 = vmatpush1.msra.mxu0 0.0
      %904 = vmatprep.subr.mxu0 0.0
      %905 = vmatpush1.msra.mxu0 0.0
      %906 = vmatprep.subr.mxu0 0.0
      %907 = vmatpush1.msra.mxu0 0.0
      %908 = vmatprep.subr.mxu0 0.0
      %909 = vmatpush1.msra.mxu0 0.0
      %910 = vmatprep.subr.mxu0 0.0
      %911 = vmatpush1.msra.mxu0 0.0
      %912 = vmatprep.subr.mxu0 0.0
      %913 = vmatpush1.msra.mxu0 0.0
      %914 = vmatprep.subr.mxu0 0.0
      %915 = vmatpush1.msra.mxu0 0.0
      %916 = vmatprep.subr.mxu0 0.0
      %917 = vmatpush1.msra.mxu0 0.0
      %918 = vmatprep.subr.mxu0 0.0
      %919 = vmatpush1.msra.mxu0 0.0
      %920 = vmatprep.subr.mxu0 0.0
      %921 = vmatpush1.msra.mxu0 0.0
      %922 = vmatprep.subr.mxu0 0.0
      %923 = vmatpush1.msra.mxu0 0.0
      %924 = vmatprep.subr.mxu0 0.0
      %925 = vmatpush1.msra.mxu0 0.0
      %926 = vmatprep.subr.mxu0 0.0
      %927 = vmatpush1.msra.mxu0 0.0
      %928 = vmatprep.subr.mxu0 0.0
      %929 = vmatpush1.msra.mxu0 0.0
      %930 = vmatprep.subr.mxu0 0.0
      %931 = vmatpush1.msra.mxu0 0.0
      %932 = vmatprep.subr.mxu0 0.0
      %933 = vmatpush1.msra.mxu0 0.0
      %934 = vmatprep.subr.mxu0 0.0
      %935 = vmatpush1.msra.mxu0 0.0
      %936 = vmatprep.subr.mxu0 0.0
      %937 = vmatpush1.msra.mxu0 0.0
      %938 = vmatprep.mubr.f32.mxu0 0.0
      %939 = vmatmul.mubr.f32.gmra.mrb[0].mxu0 %v866
      %v940 = vpop.f32.mrb[0].mxu0
      %v941 = vadd.f32 0.0, %v940
      %v942 = vpop.f32.mrb[0].mxu0
      %v943 = vadd.f32 0.0, %v942
      %944 = vdwg.mxu0
      %v945 = vadd.f32 %v854, %v941
      %v946 = vadd.f32 %v855, %v943
      %947 = vrot.lane.b32.xlu0 %v225, 94
      %v948 = vpop.permute.xlu0 %947
      %949 = vrot.lane.b32.xlu0 %v228, 94
      %v950 = vpop.permute.xlu0 %949
      %vm951 = vcmp.lt.s32.totalorder %v235, 94
      %v952 = vsel %vm951, %v948, %v950
      %v953 = vsel %vm951, %v950, %v948
      %s954 = scalar_lea.vmem %s1, 64
      %v955 = vld [vmem:[%s954] sm:$0xff]
      %v957 = vsel %vm241, %v955, 0
      %v960 = vsel %vm245, %v952, 0
      %v963 = vsel %vm245, %v953, 0
      %965 = vmatprep.subr.mxu0 %v963
      %966 = vmatpush1.msra.mxu0 %v960
      %967 = vmatprep.subr.mxu0 0.0
      %968 = vmatpush1.msra.mxu0 0.0
      %969 = vmatprep.subr.mxu0 0.0
      %970 = vmatpush1.msra.mxu0 0.0
      %971 = vmatprep.subr.mxu0 0.0
      %972 = vmatpush1.msra.mxu0 0.0
      %973 = vmatprep.subr.mxu0 0.0
      %974 = vmatpush1.msra.mxu0 0.0
      %975 = vmatprep.subr.mxu0 0.0
      %976 = vmatpush1.msra.mxu0 0.0
      %977 = vmatprep.subr.mxu0 0.0
      %978 = vmatpush1.msra.mxu0 0.0
      %979 = vmatprep.subr.mxu0 0.0
      %980 = vmatpush1.msra.mxu0 0.0
      %981 = vmatprep.subr.mxu0 0.0
      %982 = vmatpush1.msra.mxu0 0.0
      %983 = vmatprep.subr.mxu0 0.0
      %984 = vmatpush1.msra.mxu0 0.0
      %985 = vmatprep.subr.mxu0 0.0
      %986 = vmatpush1.msra.mxu0 0.0
      %987 = vmatprep.subr.mxu0 0.0
      %988 = vmatpush1.msra.mxu0 0.0
      %989 = vmatprep.subr.mxu0 0.0
      %990 = vmatpush1.msra.mxu0 0.0
      %991 = vmatprep.subr.mxu0 0.0
      %992 = vmatpush1.msra.mxu0 0.0
      %993 = vmatprep.subr.mxu0 0.0
      %994 = vmatpush1.msra.mxu0 0.0
      %995 = vmatprep.subr.mxu0 0.0
      %996 = vmatpush1.msra.mxu0 0.0
      %997 = vmatprep.subr.mxu0 0.0
      %998 = vmatpush1.msra.mxu0 0.0
      %999 = vmatprep.subr.mxu0 0.0
      %1000 = vmatpush1.msra.mxu0 0.0
      %1001 = vmatprep.subr.mxu0 0.0
      %1002 = vmatpush1.msra.mxu0 0.0
      %1003 = vmatprep.subr.mxu0 0.0
      %1004 = vmatpush1.msra.mxu0 0.0
      %1005 = vmatprep.subr.mxu0 0.0
      %1006 = vmatpush1.msra.mxu0 0.0
      %1007 = vmatprep.subr.mxu0 0.0
      %1008 = vmatpush1.msra.mxu0 0.0
      %1009 = vmatprep.subr.mxu0 0.0
      %1010 = vmatpush1.msra.mxu0 0.0
      %1011 = vmatprep.subr.mxu0 0.0
      %1012 = vmatpush1.msra.mxu0 0.0
      %1013 = vmatprep.subr.mxu0 0.0
      %1014 = vmatpush1.msra.mxu0 0.0
      %1015 = vmatprep.subr.mxu0 0.0
      %1016 = vmatpush1.msra.mxu0 0.0
      %1017 = vmatprep.subr.mxu0 0.0
      %1018 = vmatpush1.msra.mxu0 0.0
      %1019 = vmatprep.subr.mxu0 0.0
      %1020 = vmatpush1.msra.mxu0 0.0
      %1021 = vmatprep.subr.mxu0 0.0
      %1022 = vmatpush1.msra.mxu0 0.0
      %1023 = vmatprep.subr.mxu0 0.0
      %1024 = vmatpush1.msra.mxu0 0.0
      %1025 = vmatprep.subr.mxu0 0.0
      %1026 = vmatpush1.msra.mxu0 0.0
      %1027 = vmatprep.subr.mxu0 0.0
      %1028 = vmatpush1.msra.mxu0 0.0
      %1029 = vmatprep.mubr.f32.mxu0 0.0
      %1030 = vmatmul.mubr.f32.gmra.mrb[0].mxu0 %v957
      %v1031 = vpop.f32.mrb[0].mxu0
      %v1032 = vadd.f32 0.0, %v1031
      %v1033 = vpop.f32.mrb[0].mxu0
      %v1034 = vadd.f32 0.0, %v1033
      %1035 = vdwg.mxu0
      %v1036 = vadd.f32 %v945, %v1032
      %v1037 = vadd.f32 %v946, %v1034
      %v1038 = vld [vmem:[%s2] sm:$0xff]
      %1040 = vset.pattern.permute.xlu0 0
      %1041 = vperm.xlu0 %1040, %v1038
      %v1042 = vpop.permute.xlu0 %1041
      %v1044 = vadd.f32 %v1036, %v1042
      %v1045 = vadd.f32 %v1037, %v1042
      %v1046 = vmax.f32 %v1044, 0.0
      %v1047 = vmax.f32 %v1045, 0.0
      %v1048 = vld [vmem:[%s3] sm:$0xff]
      %1049 = vrot.lane.b32.xlu0 %v1046, 127
      %v1050 = vpop.permute.xlu0 %1049
      %1051 = vrot.lane.b32.xlu0 %v1047, 127
      %v1052 = vpop.permute.xlu0 %1051
      %v1053 = vsel %vm236, %v1050, %v1052
      %v1054 = vsel %vm236, %v1052, %v1050
      %s1055 = scalar_lea.vmem %s3, 8
      %v1056 = vld [vmem:[%s1055] sm:$0xff]
      %vm1057 = vcmask 64512
      %v1059 = vsel %vm1057, %v1056, 0
      %1061 = vmatprep.subr.mxu0 %v1054
      %1062 = vmatpush1.msra.mxu0 %v1053
      %1063 = vmatprep.subr.mxu0 0.0
      %1064 = vmatpush1.msra.mxu0 0.0
      %1065 = vmatprep.subr.mxu0 0.0
      %1066 = vmatpush1.msra.mxu0 0.0
      %1067 = vmatprep.subr.mxu0 0.0
      %1068 = vmatpush1.msra.mxu0 0.0
      %1069 = vmatprep.subr.mxu0 0.0
      %1070 = vmatpush1.msra.mxu0 0.0
      %1071 = vmatprep.subr.mxu0 0.0
      %1072 = vmatpush1.msra.mxu0 0.0
      %1073 = vmatprep.subr.mxu0 0.0
      %1074 = vmatpush1.msra.mxu0 0.0
      %1075 = vmatprep.subr.mxu0 0.0
      %1076 = vmatpush1.msra.mxu0 0.0
      %1077 = vmatprep.subr.mxu0 0.0
      %1078 = vmatpush1.msra.mxu0 0.0
      %1079 = vmatprep.subr.mxu0 0.0
      %1080 = vmatpush1.msra.mxu0 0.0
      %1081 = vmatprep.subr.mxu0 0.0
      %1082 = vmatpush1.msra.mxu0 0.0
      %1083 = vmatprep.subr.mxu0 0.0
      %1084 = vmatpush1.msra.mxu0 0.0
      %1085 = vmatprep.subr.mxu0 0.0
      %1086 = vmatpush1.msra.mxu0 0.0
      %1087 = vmatprep.subr.mxu0 0.0
      %1088 = vmatpush1.msra.mxu0 0.0
      %1089 = vmatprep.subr.mxu0 0.0
      %1090 = vmatpush1.msra.mxu0 0.0
      %1091 = vmatprep.subr.mxu0 0.0
      %1092 = vmatpush1.msra.mxu0 0.0
      %1093 = vmatprep.subr.mxu0 0.0
      %1094 = vmatpush1.msra.mxu0 0.0
      %1095 = vmatprep.subr.mxu0 0.0
      %1096 = vmatpush1.msra.mxu0 0.0
      %1097 = vmatprep.subr.mxu0 0.0
      %1098 = vmatpush1.msra.mxu0 0.0
      %1099 = vmatprep.subr.mxu0 0.0
      %1100 = vmatpush1.msra.mxu0 0.0
      %1101 = vmatprep.subr.mxu0 0.0
      %1102 = vmatpush1.msra.mxu0 0.0
      %1103 = vmatprep.subr.mxu0 0.0
      %1104 = vmatpush1.msra.mxu0 0.0
      %1105 = vmatprep.subr.mxu0 0.0
      %1106 = vmatpush1.msra.mxu0 0.0
      %1107 = vmatprep.subr.mxu0 0.0
      %1108 = vmatpush1.msra.mxu0 0.0
      %1109 = vmatprep.subr.mxu0 0.0
      %1110 = vmatpush1.msra.mxu0 0.0
      %1111 = vmatprep.subr.mxu0 0.0
      %1112 = vmatpush1.msra.mxu0 0.0
      %1113 = vmatprep.subr.mxu0 0.0
      %1114 = vmatpush1.msra.mxu0 0.0
      %1115 = vmatprep.subr.mxu0 0.0
      %1116 = vmatpush1.msra.mxu0 0.0
      %1117 = vmatprep.subr.mxu0 0.0
      %1118 = vmatpush1.msra.mxu0 0.0
      %1119 = vmatprep.subr.mxu0 0.0
      %1120 = vmatpush1.msra.mxu0 0.0
      %1121 = vmatprep.subr.mxu0 0.0
      %1122 = vmatpush1.msra.mxu0 0.0
      %1123 = vmatprep.subr.mxu0 0.0
      %1124 = vmatpush1.msra.mxu0 0.0
      %1125 = vmatprep.mubr.f32.mxu0 0.0
      %1126 = vmatmul.mubr.f32.gmra.mrb[0].mxu0 %v1059
      %v1127 = vpop.f32.mrb[0].mxu0
      %v1128 = vadd.f32 0.0, %v1127
      %v1129 = vpop.f32.mrb[0].mxu0
      %v1130 = vadd.f32 0.0, %v1129
      %1131 = vdwg.mxu0
      %v1133 = vsel %vm1057, %v1048, 0
      %1135 = vmatprep.subr.mxu0 %v1047
      %1136 = vmatpush1.msra.mxu0 %v1046
      %1137 = vmatprep.subr.mxu0 0.0
      %1138 = vmatpush1.msra.mxu0 0.0
      %1139 = vmatprep.subr.mxu0 0.0
      %1140 = vmatpush1.msra.mxu0 0.0
      %1141 = vmatprep.subr.mxu0 0.0
      %1142 = vmatpush1.msra.mxu0 0.0
      %1143 = vmatprep.subr.mxu0 0.0
      %1144 = vmatpush1.msra.mxu0 0.0
      %1145 = vmatprep.subr.mxu0 0.0
      %1146 = vmatpush1.msra.mxu0 0.0
      %1147 = vmatprep.subr.mxu0 0.0
      %1148 = vmatpush1.msra.mxu0 0.0
      %1149 = vmatprep.subr.mxu0 0.0
      %1150 = vmatpush1.msra.mxu0 0.0
      %1151 = vmatprep.subr.mxu0 0.0
      %1152 = vmatpush1.msra.mxu0 0.0
      %1153 = vmatprep.subr.mxu0 0.0
      %1154 = vmatpush1.msra.mxu0 0.0
      %1155 = vmatprep.subr.mxu0 0.0
      %1156 = vmatpush1.msra.mxu0 0.0
      %1157 = vmatprep.subr.mxu0 0.0
      %1158 = vmatpush1.msra.mxu0 0.0
      %1159 = vmatprep.subr.mxu0 0.0
      %1160 = vmatpush1.msra.mxu0 0.0
      %1161 = vmatprep.subr.mxu0 0.0
      %1162 = vmatpush1.msra.mxu0 0.0
      %1163 = vmatprep.subr.mxu0 0.0
      %1164 = vmatpush1.msra.mxu0 0.0
      %1165 = vmatprep.subr.mxu0 0.0
      %1166 = vmatpush1.msra.mxu0 0.0
      %1167 = vmatprep.subr.mxu0 0.0
      %1168 = vmatpush1.msra.mxu0 0.0
      %1169 = vmatprep.subr.mxu0 0.0
      %1170 = vmatpush1.msra.mxu0 0.0
      %1171 = vmatprep.subr.mxu0 0.0
      %1172 = vmatpush1.msra.mxu0 0.0
      %1173 = vmatprep.subr.mxu0 0.0
      %1174 = vmatpush1.msra.mxu0 0.0
      %1175 = vmatprep.subr.mxu0 0.0
      %1176 = vmatpush1.msra.mxu0 0.0
      %1177 = vmatprep.subr.mxu0 0.0
      %1178 = vmatpush1.msra.mxu0 0.0
      %1179 = vmatprep.subr.mxu0 0.0
      %1180 = vmatpush1.msra.mxu0 0.0
      %1181 = vmatprep.subr.mxu0 0.0
      %1182 = vmatpush1.msra.mxu0 0.0
      %1183 = vmatprep.subr.mxu0 0.0
      %1184 = vmatpush1.msra.mxu0 0.0
      %1185 = vmatprep.subr.mxu0 0.0
      %1186 = vmatpush1.msra.mxu0 0.0
      %1187 = vmatprep.subr.mxu0 0.0
      %1188 = vmatpush1.msra.mxu0 0.0
      %1189 = vmatprep.subr.mxu0 0.0
      %1190 = vmatpush1.msra.mxu0 0.0
      %1191 = vmatprep.subr.mxu0 0.0
      %1192 = vmatpush1.msra.mxu0 0.0
      %1193 = vmatprep.subr.mxu0 0.0
      %1194 = vmatpush1.msra.mxu0 0.0
      %1195 = vmatprep.subr.mxu0 0.0
      %1196 = vmatpush1.msra.mxu0 0.0
      %1197 = vmatprep.subr.mxu0 0.0
      %1198 = vmatpush1.msra.mxu0 0.0
      %1199 = vmatprep.mubr.f32.mxu0 0.0
      %1200 = vmatmul.mubr.f32.gmra.mrb[0].mxu0 %v1133
      %v1201 = vpop.f32.mrb[0].mxu0
      %v1202 = vadd.f32 %v1128, %v1201
      %v1203 = vpop.f32.mrb[0].mxu0
      %v1204 = vadd.f32 %v1130, %v1203
      %1205 = vdwg.mxu0
      %1206 = vrot.lane.b32.xlu0 %v1046, 126
      %v1207 = vpop.permute.xlu0 %1206
      %1208 = vrot.lane.b32.xlu0 %v1047, 126
      %v1209 = vpop.permute.xlu0 %1208
      %v1210 = vsel %vm405, %v1207, %v1209
      %v1211 = vsel %vm405, %v1209, %v1207
      %s1212 = scalar_lea.vmem %s3, 16
      %v1213 = vld [vmem:[%s1212] sm:$0xff]
      %v1215 = vsel %vm1057, %v1213, 0
      %1217 = vmatprep.subr.mxu0 %v1211
      %1218 = vmatpush1.msra.mxu0 %v1210
      %1219 = vmatprep.subr.mxu0 0.0
      %1220 = vmatpush1.msra.mxu0 0.0
      %1221 = vmatprep.subr.mxu0 0.0
      %1222 = vmatpush1.msra.mxu0 0.0
      %1223 = vmatprep.subr.mxu0 0.0
      %1224 = vmatpush1.msra.mxu0 0.0
      %1225 = vmatprep.subr.mxu0 0.0
      %1226 = vmatpush1.msra.mxu0 0.0
      %1227 = vmatprep.subr.mxu0 0.0
      %1228 = vmatpush1.msra.mxu0 0.0
      %1229 = vmatprep.subr.mxu0 0.0
      %1230 = vmatpush1.msra.mxu0 0.0
      %1231 = vmatprep.subr.mxu0 0.0
      %1232 = vmatpush1.msra.mxu0 0.0
      %1233 = vmatprep.subr.mxu0 0.0
      %1234 = vmatpush1.msra.mxu0 0.0
      %1235 = vmatprep.subr.mxu0 0.0
      %1236 = vmatpush1.msra.mxu0 0.0
      %1237 = vmatprep.subr.mxu0 0.0
      %1238 = vmatpush1.msra.mxu0 0.0
      %1239 = vmatprep.subr.mxu0 0.0
      %1240 = vmatpush1.msra.mxu0 0.0
      %1241 = vmatprep.subr.mxu0 0.0
      %1242 = vmatpush1.msra.mxu0 0.0
      %1243 = vmatprep.subr.mxu0 0.0
      %1244 = vmatpush1.msra.mxu0 0.0
      %1245 = vmatprep.subr.mxu0 0.0
      %1246 = vmatpush1.msra.mxu0 0.0
      %1247 = vmatprep.subr.mxu0 0.0
      %1248 = vmatpush1.msra.mxu0 0.0
      %1249 = vmatprep.subr.mxu0 0.0
      %1250 = vmatpush1.msra.mxu0 0.0
      %1251 = vmatprep.subr.mxu0 0.0
      %1252 = vmatpush1.msra.mxu0 0.0
      %1253 = vmatprep.subr.mxu0 0.0
      %1254 = vmatpush1.msra.mxu0 0.0
      %1255 = vmatprep.subr.mxu0 0.0
      %1256 = vmatpush1.msra.mxu0 0.0
      %1257 = vmatprep.subr.mxu0 0.0
      %1258 = vmatpush1.msra.mxu0 0.0
      %1259 = vmatprep.subr.mxu0 0.0
      %1260 = vmatpush1.msra.mxu0 0.0
      %1261 = vmatprep.subr.mxu0 0.0
      %1262 = vmatpush1.msra.mxu0 0.0
      %1263 = vmatprep.subr.mxu0 0.0
      %1264 = vmatpush1.msra.mxu0 0.0
      %1265 = vmatprep.subr.mxu0 0.0
      %1266 = vmatpush1.msra.mxu0 0.0
      %1267 = vmatprep.subr.mxu0 0.0
      %1268 = vmatpush1.msra.mxu0 0.0
      %1269 = vmatprep.subr.mxu0 0.0
      %1270 = vmatpush1.msra.mxu0 0.0
      %1271 = vmatprep.subr.mxu0 0.0
      %1272 = vmatpush1.msra.mxu0 0.0
      %1273 = vmatprep.subr.mxu0 0.0
      %1274 = vmatpush1.msra.mxu0 0.0
      %1275 = vmatprep.subr.mxu0 0.0
      %1276 = vmatpush1.msra.mxu0 0.0
      %1277 = vmatprep.subr.mxu0 0.0
      %1278 = vmatpush1.msra.mxu0 0.0
      %1279 = vmatprep.subr.mxu0 0.0
      %1280 = vmatpush1.msra.mxu0 0.0
      %1281 = vmatprep.mubr.f32.mxu0 0.0
      %1282 = vmatmul.mubr.f32.gmra.mrb[0].mxu0 %v1215
      %v1283 = vpop.f32.mrb[0].mxu0
      %v1284 = vadd.f32 0.0, %v1283
      %v1285 = vpop.f32.mrb[0].mxu0
      %v1286 = vadd.f32 0.0, %v1285
      %1287 = vdwg.mxu0
      %v1288 = vadd.f32 %v1202, %v1284
      %v1289 = vadd.f32 %v1204, %v1286
      %1290 = vrot.lane.b32.xlu0 %v1046, 112
      %v1291 = vpop.permute.xlu0 %1290
      %1292 = vrot.lane.b32.xlu0 %v1047, 112
      %v1293 = vpop.permute.xlu0 %1292
      %v1294 = vsel %vm496, %v1291, %v1293
      %v1295 = vsel %vm496, %v1293, %v1291
      %s1296 = scalar_lea.vmem %s3, 24
      %v1297 = vld [vmem:[%s1296] sm:$0xff]
      %v1299 = vsel %vm1057, %v1297, 0
      %1301 = vmatprep.subr.mxu0 %v1295
      %1302 = vmatpush1.msra.mxu0 %v1294
      %1303 = vmatprep.subr.mxu0 0.0
      %1304 = vmatpush1.msra.mxu0 0.0
      %1305 = vmatprep.subr.mxu0 0.0
      %1306 = vmatpush1.msra.mxu0 0.0
      %1307 = vmatprep.subr.mxu0 0.0
      %1308 = vmatpush1.msra.mxu0 0.0
      %1309 = vmatprep.subr.mxu0 0.0
      %1310 = vmatpush1.msra.mxu0 0.0
      %1311 = vmatprep.subr.mxu0 0.0
      %1312 = vmatpush1.msra.mxu0 0.0
      %1313 = vmatprep.subr.mxu0 0.0
      %1314 = vmatpush1.msra.mxu0 0.0
      %1315 = vmatprep.subr.mxu0 0.0
      %1316 = vmatpush1.msra.mxu0 0.0
      %1317 = vmatprep.subr.mxu0 0.0
      %1318 = vmatpush1.msra.mxu0 0.0
      %1319 = vmatprep.subr.mxu0 0.0
      %1320 = vmatpush1.msra.mxu0 0.0
      %1321 = vmatprep.subr.mxu0 0.0
      %1322 = vmatpush1.msra.mxu0 0.0
      %1323 = vmatprep.subr.mxu0 0.0
      %1324 = vmatpush1.msra.mxu0 0.0
      %1325 = vmatprep.subr.mxu0 0.0
      %1326 = vmatpush1.msra.mxu0 0.0
      %1327 = vmatprep.subr.mxu0 0.0
      %1328 = vmatpush1.msra.mxu0 0.0
      %1329 = vmatprep.subr.mxu0 0.0
      %1330 = vmatpush1.msra.mxu0 0.0
      %1331 = vmatprep.subr.mxu0 0.0
      %1332 = vmatpush1.msra.mxu0 0.0
      %1333 = vmatprep.subr.mxu0 0.0
      %1334 = vmatpush1.msra.mxu0 0.0
      %1335 = vmatprep.subr.mxu0 0.0
      %1336 = vmatpush1.msra.mxu0 0.0
      %1337 = vmatprep.subr.mxu0 0.0
      %1338 = vmatpush1.msra.mxu0 0.0
      %1339 = vmatprep.subr.mxu0 0.0
      %1340 = vmatpush1.msra.mxu0 0.0
      %1341 = vmatprep.subr.mxu0 0.0
      %1342 = vmatpush1.msra.mxu0 0.0
      %1343 = vmatprep.subr.mxu0 0.0
      %1344 = vmatpush1.msra.mxu0 0.0
      %1345 = vmatprep.subr.mxu0 0.0
      %1346 = vmatpush1.msra.mxu0 0.0
      %1347 = vmatprep.subr.mxu0 0.0
      %1348 = vmatpush1.msra.mxu0 0.0
      %1349 = vmatprep.subr.mxu0 0.0
      %1350 = vmatpush1.msra.mxu0 0.0
      %1351 = vmatprep.subr.mxu0 0.0
      %1352 = vmatpush1.msra.mxu0 0.0
      %1353 = vmatprep.subr.mxu0 0.0
      %1354 = vmatpush1.msra.mxu0 0.0
      %1355 = vmatprep.subr.mxu0 0.0
      %1356 = vmatpush1.msra.mxu0 0.0
      %1357 = vmatprep.subr.mxu0 0.0
      %1358 = vmatpush1.msra.mxu0 0.0
      %1359 = vmatprep.subr.mxu0 0.0
      %1360 = vmatpush1.msra.mxu0 0.0
      %1361 = vmatprep.subr.mxu0 0.0
      %1362 = vmatpush1.msra.mxu0 0.0
      %1363 = vmatprep.subr.mxu0 0.0
      %1364 = vmatpush1.msra.mxu0 0.0
      %1365 = vmatprep.mubr.f32.mxu0 0.0
      %1366 = vmatmul.mubr.f32.gmra.mrb[0].mxu0 %v1299
      %v1367 = vpop.f32.mrb[0].mxu0
      %v1368 = vadd.f32 0.0, %v1367
      %v1369 = vpop.f32.mrb[0].mxu0
      %v1370 = vadd.f32 0.0, %v1369
      %1371 = vdwg.mxu0
      %v1372 = vadd.f32 %v1288, %v1368
      %v1373 = vadd.f32 %v1289, %v1370
      %1374 = vrot.lane.b32.xlu0 %v1046, 111
      %v1375 = vpop.permute.xlu0 %1374
      %1376 = vrot.lane.b32.xlu0 %v1047, 111
      %v1377 = vpop.permute.xlu0 %1376
      %v1378 = vsel %vm587, %v1375, %v1377
      %v1379 = vsel %vm587, %v1377, %v1375
      %s1380 = scalar_lea.vmem %s3, 32
      %v1381 = vld [vmem:[%s1380] sm:$0xff]
      %v1383 = vsel %vm1057, %v1381, 0
      %1385 = vmatprep.subr.mxu0 %v1379
      %1386 = vmatpush1.msra.mxu0 %v1378
      %1387 = vmatprep.subr.mxu0 0.0
      %1388 = vmatpush1.msra.mxu0 0.0
      %1389 = vmatprep.subr.mxu0 0.0
      %1390 = vmatpush1.msra.mxu0 0.0
      %1391 = vmatprep.subr.mxu0 0.0
      %1392 = vmatpush1.msra.mxu0 0.0
      %1393 = vmatprep.subr.mxu0 0.0
      %1394 = vmatpush1.msra.mxu0 0.0
      %1395 = vmatprep.subr.mxu0 0.0
      %1396 = vmatpush1.msra.mxu0 0.0
      %1397 = vmatprep.subr.mxu0 0.0
      %1398 = vmatpush1.msra.mxu0 0.0
      %1399 = vmatprep.subr.mxu0 0.0
      %1400 = vmatpush1.msra.mxu0 0.0
      %1401 = vmatprep.subr.mxu0 0.0
      %1402 = vmatpush1.msra.mxu0 0.0
      %1403 = vmatprep.subr.mxu0 0.0
      %1404 = vmatpush1.msra.mxu0 0.0
      %1405 = vmatprep.subr.mxu0 0.0
      %1406 = vmatpush1.msra.mxu0 0.0
      %1407 = vmatprep.subr.mxu0 0.0
      %1408 = vmatpush1.msra.mxu0 0.0
      %1409 = vmatprep.subr.mxu0 0.0
      %1410 = vmatpush1.msra.mxu0 0.0
      %1411 = vmatprep.subr.mxu0 0.0
      %1412 = vmatpush1.msra.mxu0 0.0
      %1413 = vmatprep.subr.mxu0 0.0
      %1414 = vmatpush1.msra.mxu0 0.0
      %1415 = vmatprep.subr.mxu0 0.0
      %1416 = vmatpush1.msra.mxu0 0.0
      %1417 = vmatprep.subr.mxu0 0.0
      %1418 = vmatpush1.msra.mxu0 0.0
      %1419 = vmatprep.subr.mxu0 0.0
      %1420 = vmatpush1.msra.mxu0 0.0
      %1421 = vmatprep.subr.mxu0 0.0
      %1422 = vmatpush1.msra.mxu0 0.0
      %1423 = vmatprep.subr.mxu0 0.0
      %1424 = vmatpush1.msra.mxu0 0.0
      %1425 = vmatprep.subr.mxu0 0.0
      %1426 = vmatpush1.msra.mxu0 0.0
      %1427 = vmatprep.subr.mxu0 0.0
      %1428 = vmatpush1.msra.mxu0 0.0
      %1429 = vmatprep.subr.mxu0 0.0
      %1430 = vmatpush1.msra.mxu0 0.0
      %1431 = vmatprep.subr.mxu0 0.0
      %1432 = vmatpush1.msra.mxu0 0.0
      %1433 = vmatprep.subr.mxu0 0.0
      %1434 = vmatpush1.msra.mxu0 0.0
      %1435 = vmatprep.subr.mxu0 0.0
      %1436 = vmatpush1.msra.mxu0 0.0
      %1437 = vmatprep.subr.mxu0 0.0
      %1438 = vmatpush1.msra.mxu0 0.0
      %1439 = vmatprep.subr.mxu0 0.0
      %1440 = vmatpush1.msra.mxu0 0.0
      %1441 = vmatprep.subr.mxu0 0.0
      %1442 = vmatpush1.msra.mxu0 0.0
      %1443 = vmatprep.subr.mxu0 0.0
      %1444 = vmatpush1.msra.mxu0 0.0
      %1445 = vmatprep.subr.mxu0 0.0
      %1446 = vmatpush1.msra.mxu0 0.0
      %1447 = vmatprep.subr.mxu0 0.0
      %1448 = vmatpush1.msra.mxu0 0.0
      %1449 = vmatprep.mubr.f32.mxu0 0.0
      %1450 = vmatmul.mubr.f32.gmra.mrb[0].mxu0 %v1383
      %v1451 = vpop.f32.mrb[0].mxu0
      %v1452 = vadd.f32 0.0, %v1451
      %v1453 = vpop.f32.mrb[0].mxu0
      %v1454 = vadd.f32 0.0, %v1453
      %1455 = vdwg.mxu0
      %v1456 = vadd.f32 %v1372, %v1452
      %v1457 = vadd.f32 %v1373, %v1454
      %1458 = vrot.lane.b32.xlu0 %v1046, 110
      %v1459 = vpop.permute.xlu0 %1458
      %1460 = vrot.lane.b32.xlu0 %v1047, 110
      %v1461 = vpop.permute.xlu0 %1460
      %v1462 = vsel %vm678, %v1459, %v1461
      %v1463 = vsel %vm678, %v1461, %v1459
      %s1464 = scalar_lea.vmem %s3, 40
      %v1465 = vld [vmem:[%s1464] sm:$0xff]
      %v1467 = vsel %vm1057, %v1465, 0
      %1469 = vmatprep.subr.mxu0 %v1463
      %1470 = vmatpush1.msra.mxu0 %v1462
      %1471 = vmatprep.subr.mxu0 0.0
      %1472 = vmatpush1.msra.mxu0 0.0
      %1473 = vmatprep.subr.mxu0 0.0
      %1474 = vmatpush1.msra.mxu0 0.0
      %1475 = vmatprep.subr.mxu0 0.0
      %1476 = vmatpush1.msra.mxu0 0.0
      %1477 = vmatprep.subr.mxu0 0.0
      %1478 = vmatpush1.msra.mxu0 0.0
      %1479 = vmatprep.subr.mxu0 0.0
      %1480 = vmatpush1.msra.mxu0 0.0
      %1481 = vmatprep.subr.mxu0 0.0
      %1482 = vmatpush1.msra.mxu0 0.0
      %1483 = vmatprep.subr.mxu0 0.0
      %1484 = vmatpush1.msra.mxu0 0.0
      %1485 = vmatprep.subr.mxu0 0.0
      %1486 = vmatpush1.msra.mxu0 0.0
      %1487 = vmatprep.subr.mxu0 0.0
      %1488 = vmatpush1.msra.mxu0 0.0
      %1489 = vmatprep.subr.mxu0 0.0
      %1490 = vmatpush1.msra.mxu0 0.0
      %1491 = vmatprep.subr.mxu0 0.0
      %1492 = vmatpush1.msra.mxu0 0.0
      %1493 = vmatprep.subr.mxu0 0.0
      %1494 = vmatpush1.msra.mxu0 0.0
      %1495 = vmatprep.subr.mxu0 0.0
      %1496 = vmatpush1.msra.mxu0 0.0
      %1497 = vmatprep.subr.mxu0 0.0
      %1498 = vmatpush1.msra.mxu0 0.0
      %1499 = vmatprep.subr.mxu0 0.0
      %1500 = vmatpush1.msra.mxu0 0.0
      %1501 = vmatprep.subr.mxu0 0.0
      %1502 = vmatpush1.msra.mxu0 0.0
      %1503 = vmatprep.subr.mxu0 0.0
      %1504 = vmatpush1.msra.mxu0 0.0
      %1505 = vmatprep.subr.mxu0 0.0
      %1506 = vmatpush1.msra.mxu0 0.0
      %1507 = vmatprep.subr.mxu0 0.0
      %1508 = vmatpush1.msra.mxu0 0.0
      %1509 = vmatprep.subr.mxu0 0.0
      %1510 = vmatpush1.msra.mxu0 0.0
      %1511 = vmatprep.subr.mxu0 0.0
      %1512 = vmatpush1.msra.mxu0 0.0
      %1513 = vmatprep.subr.mxu0 0.0
      %1514 = vmatpush1.msra.mxu0 0.0
      %1515 = vmatprep.subr.mxu0 0.0
      %1516 = vmatpush1.msra.mxu0 0.0
      %1517 = vmatprep.subr.mxu0 0.0
      %1518 = vmatpush1.msra.mxu0 0.0
      %1519 = vmatprep.subr.mxu0 0.0
      %1520 = vmatpush1.msra.mxu0 0.0
      %1521 = vmatprep.subr.mxu0 0.0
      %1522 = vmatpush1.msra.mxu0 0.0
      %1523 = vmatprep.subr.mxu0 0.0
      %1524 = vmatpush1.msra.mxu0 0.0
      %1525 = vmatprep.subr.mxu0 0.0
      %1526 = vmatpush1.msra.mxu0 0.0
      %1527 = vmatprep.subr.mxu0 0.0
      %1528 = vmatpush1.msra.mxu0 0.0
      %1529 = vmatprep.subr.mxu0 0.0
      %1530 = vmatpush1.msra.mxu0 0.0
      %1531 = vmatprep.subr.mxu0 0.0
      %1532 = vmatpush1.msra.mxu0 0.0
      %1533 = vmatprep.mubr.f32.mxu0 0.0
      %1534 = vmatmul.mubr.f32.gmra.mrb[0].mxu0 %v1467
      %v1535 = vpop.f32.mrb[0].mxu0
      %v1536 = vadd.f32 0.0, %v1535
      %v1537 = vpop.f32.mrb[0].mxu0
      %v1538 = vadd.f32 0.0, %v1537
      %1539 = vdwg.mxu0
      %v1540 = vadd.f32 %v1456, %v1536
      %v1541 = vadd.f32 %v1457, %v1538
      %1542 = vrot.lane.b32.xlu0 %v1046, 96
      %v1543 = vpop.permute.xlu0 %1542
      %1544 = vrot.lane.b32.xlu0 %v1047, 96
      %v1545 = vpop.permute.xlu0 %1544
      %v1546 = vsel %vm769, %v1543, %v1545
      %v1547 = vsel %vm769, %v1545, %v1543
      %s1548 = scalar_lea.vmem %s3, 48
      %v1549 = vld [vmem:[%s1548] sm:$0xff]
      %v1551 = vsel %vm1057, %v1549, 0
      %1553 = vmatprep.subr.mxu0 %v1547
      %1554 = vmatpush1.msra.mxu0 %v1546
      %1555 = vmatprep.subr.mxu0 0.0
      %1556 = vmatpush1.msra.mxu0 0.0
      %1557 = vmatprep.subr.mxu0 0.0
      %1558 = vmatpush1.msra.mxu0 0.0
      %1559 = vmatprep.subr.mxu0 0.0
      %1560 = vmatpush1.msra.mxu0 0.0
      %1561 = vmatprep.subr.mxu0 0.0
      %1562 = vmatpush1.msra.mxu0 0.0
      %1563 = vmatprep.subr.mxu0 0.0
      %1564 = vmatpush1.msra.mxu0 0.0
      %1565 = vmatprep.subr.mxu0 0.0
      %1566 = vmatpush1.msra.mxu0 0.0
      %1567 = vmatprep.subr.mxu0 0.0
      %1568 = vmatpush1.msra.mxu0 0.0
      %1569 = vmatprep.subr.mxu0 0.0
      %1570 = vmatpush1.msra.mxu0 0.0
      %1571 = vmatprep.subr.mxu0 0.0
      %1572 = vmatpush1.msra.mxu0 0.0
      %1573 = vmatprep.subr.mxu0 0.0
      %1574 = vmatpush1.msra.mxu0 0.0
      %1575 = vmatprep.subr.mxu0 0.0
      %1576 = vmatpush1.msra.mxu0 0.0
      %1577 = vmatprep.subr.mxu0 0.0
      %1578 = vmatpush1.msra.mxu0 0.0
      %1579 = vmatprep.subr.mxu0 0.0
      %1580 = vmatpush1.msra.mxu0 0.0
      %1581 = vmatprep.subr.mxu0 0.0
      %1582 = vmatpush1.msra.mxu0 0.0
      %1583 = vmatprep.subr.mxu0 0.0
      %1584 = vmatpush1.msra.mxu0 0.0
      %1585 = vmatprep.subr.mxu0 0.0
      %1586 = vmatpush1.msra.mxu0 0.0
      %1587 = vmatprep.subr.mxu0 0.0
      %1588 = vmatpush1.msra.mxu0 0.0
      %1589 = vmatprep.subr.mxu0 0.0
      %1590 = vmatpush1.msra.mxu0 0.0
      %1591 = vmatprep.subr.mxu0 0.0
      %1592 = vmatpush1.msra.mxu0 0.0
      %1593 = vmatprep.subr.mxu0 0.0
      %1594 = vmatpush1.msra.mxu0 0.0
      %1595 = vmatprep.subr.mxu0 0.0
      %1596 = vmatpush1.msra.mxu0 0.0
      %1597 = vmatprep.subr.mxu0 0.0
      %1598 = vmatpush1.msra.mxu0 0.0
      %1599 = vmatprep.subr.mxu0 0.0
      %1600 = vmatpush1.msra.mxu0 0.0
      %1601 = vmatprep.subr.mxu0 0.0
      %1602 = vmatpush1.msra.mxu0 0.0
      %1603 = vmatprep.subr.mxu0 0.0
      %1604 = vmatpush1.msra.mxu0 0.0
      %1605 = vmatprep.subr.mxu0 0.0
      %1606 = vmatpush1.msra.mxu0 0.0
      %1607 = vmatprep.subr.mxu0 0.0
      %1608 = vmatpush1.msra.mxu0 0.0
      %1609 = vmatprep.subr.mxu0 0.0
      %1610 = vmatpush1.msra.mxu0 0.0
      %1611 = vmatprep.subr.mxu0 0.0
      %1612 = vmatpush1.msra.mxu0 0.0
      %1613 = vmatprep.subr.mxu0 0.0
      %1614 = vmatpush1.msra.mxu0 0.0
      %1615 = vmatprep.subr.mxu0 0.0
      %1616 = vmatpush1.msra.mxu0 0.0
      %1617 = vmatprep.mubr.f32.mxu0 0.0
      %1618 = vmatmul.mubr.f32.gmra.mrb[0].mxu0 %v1551
      %v1619 = vpop.f32.mrb[0].mxu0
      %v1620 = vadd.f32 0.0, %v1619
      %v1621 = vpop.f32.mrb[0].mxu0
      %v1622 = vadd.f32 0.0, %v1621
      %1623 = vdwg.mxu0
      %v1624 = vadd.f32 %v1540, %v1620
      %v1625 = vadd.f32 %v1541, %v1622
      %1626 = vrot.lane.b32.xlu0 %v1046, 95
      %v1627 = vpop.permute.xlu0 %1626
      %1628 = vrot.lane.b32.xlu0 %v1047, 95
      %v1629 = vpop.permute.xlu0 %1628
      %v1630 = vsel %vm860, %v1627, %v1629
      %v1631 = vsel %vm860, %v1629, %v1627
      %s1632 = scalar_lea.vmem %s3, 56
      %v1633 = vld [vmem:[%s1632] sm:$0xff]
      %v1635 = vsel %vm1057, %v1633, 0
      %1637 = vmatprep.subr.mxu0 %v1631
      %1638 = vmatpush1.msra.mxu0 %v1630
      %1639 = vmatprep.subr.mxu0 0.0
      %1640 = vmatpush1.msra.mxu0 0.0
      %1641 = vmatprep.subr.mxu0 0.0
      %1642 = vmatpush1.msra.mxu0 0.0
      %1643 = vmatprep.subr.mxu0 0.0
      %1644 = vmatpush1.msra.mxu0 0.0
      %1645 = vmatprep.subr.mxu0 0.0
      %1646 = vmatpush1.msra.mxu0 0.0
      %1647 = vmatprep.subr.mxu0 0.0
      %1648 = vmatpush1.msra.mxu0 0.0
      %1649 = vmatprep.subr.mxu0 0.0
      %1650 = vmatpush1.msra.mxu0 0.0
      %1651 = vmatprep.subr.mxu0 0.0
      %1652 = vmatpush1.msra.mxu0 0.0
      %1653 = vmatprep.subr.mxu0 0.0
      %1654 = vmatpush1.msra.mxu0 0.0
      %1655 = vmatprep.subr.mxu0 0.0
      %1656 = vmatpush1.msra.mxu0 0.0
      %1657 = vmatprep.subr.mxu0 0.0
      %1658 = vmatpush1.msra.mxu0 0.0
      %1659 = vmatprep.subr.mxu0 0.0
      %1660 = vmatpush1.msra.mxu0 0.0
      %1661 = vmatprep.subr.mxu0 0.0
      %1662 = vmatpush1.msra.mxu0 0.0
      %1663 = vmatprep.subr.mxu0 0.0
      %1664 = vmatpush1.msra.mxu0 0.0
      %1665 = vmatprep.subr.mxu0 0.0
      %1666 = vmatpush1.msra.mxu0 0.0
      %1667 = vmatprep.subr.mxu0 0.0
      %1668 = vmatpush1.msra.mxu0 0.0
      %1669 = vmatprep.subr.mxu0 0.0
      %1670 = vmatpush1.msra.mxu0 0.0
      %1671 = vmatprep.subr.mxu0 0.0
      %1672 = vmatpush1.msra.mxu0 0.0
      %1673 = vmatprep.subr.mxu0 0.0
      %1674 = vmatpush1.msra.mxu0 0.0
      %1675 = vmatprep.subr.mxu0 0.0
      %1676 = vmatpush1.msra.mxu0 0.0
      %1677 = vmatprep.subr.mxu0 0.0
      %1678 = vmatpush1.msra.mxu0 0.0
      %1679 = vmatprep.subr.mxu0 0.0
      %1680 = vmatpush1.msra.mxu0 0.0
      %1681 = vmatprep.subr.mxu0 0.0
      %1682 = vmatpush1.msra.mxu0 0.0
      %1683 = vmatprep.subr.mxu0 0.0
      %1684 = vmatpush1.msra.mxu0 0.0
      %1685 = vmatprep.subr.mxu0 0.0
      %1686 = vmatpush1.msra.mxu0 0.0
      %1687 = vmatprep.subr.mxu0 0.0
      %1688 = vmatpush1.msra.mxu0 0.0
      %1689 = vmatprep.subr.mxu0 0.0
      %1690 = vmatpush1.msra.mxu0 0.0
      %1691 = vmatprep.subr.mxu0 0.0
      %1692 = vmatpush1.msra.mxu0 0.0
      %1693 = vmatprep.subr.mxu0 0.0
      %1694 = vmatpush1.msra.mxu0 0.0
      %1695 = vmatprep.subr.mxu0 0.0
      %1696 = vmatpush1.msra.mxu0 0.0
      %1697 = vmatprep.subr.mxu0 0.0
      %1698 = vmatpush1.msra.mxu0 0.0
      %1699 = vmatprep.subr.mxu0 0.0
      %1700 = vmatpush1.msra.mxu0 0.0
      %1701 = vmatprep.mubr.f32.mxu0 0.0
      %1702 = vmatmul.mubr.f32.gmra.mrb[0].mxu0 %v1635
      %v1703 = vpop.f32.mrb[0].mxu0
      %v1704 = vadd.f32 0.0, %v1703
      %v1705 = vpop.f32.mrb[0].mxu0
      %v1706 = vadd.f32 0.0, %v1705
      %1707 = vdwg.mxu0
      %v1708 = vadd.f32 %v1624, %v1704
      %v1709 = vadd.f32 %v1625, %v1706
      %1710 = vrot.lane.b32.xlu0 %v1046, 94
      %v1711 = vpop.permute.xlu0 %1710
      %1712 = vrot.lane.b32.xlu0 %v1047, 94
      %v1713 = vpop.permute.xlu0 %1712
      %v1714 = vsel %vm951, %v1711, %v1713
      %v1715 = vsel %vm951, %v1713, %v1711
      %s1716 = scalar_lea.vmem %s3, 64
      %v1717 = vld [vmem:[%s1716] sm:$0xff]
      %v1719 = vsel %vm1057, %v1717, 0
      %1721 = vmatprep.subr.mxu0 %v1715
      %1722 = vmatpush1.msra.mxu0 %v1714
      %1723 = vmatprep.subr.mxu0 0.0
      %1724 = vmatpush1.msra.mxu0 0.0
      %1725 = vmatprep.subr.mxu0 0.0
      %1726 = vmatpush1.msra.mxu0 0.0
      %1727 = vmatprep.subr.mxu0 0.0
      %1728 = vmatpush1.msra.mxu0 0.0
      %1729 = vmatprep.subr.mxu0 0.0
      %1730 = vmatpush1.msra.mxu0 0.0
      %1731 = vmatprep.subr.mxu0 0.0
      %1732 = vmatpush1.msra.mxu0 0.0
      %1733 = vmatprep.subr.mxu0 0.0
      %1734 = vmatpush1.msra.mxu0 0.0
      %1735 = vmatprep.subr.mxu0 0.0
      %1736 = vmatpush1.msra.mxu0 0.0
      %1737 = vmatprep.subr.mxu0 0.0
      %1738 = vmatpush1.msra.mxu0 0.0
      %1739 = vmatprep.subr.mxu0 0.0
      %1740 = vmatpush1.msra.mxu0 0.0
      %1741 = vmatprep.subr.mxu0 0.0
      %1742 = vmatpush1.msra.mxu0 0.0
      %1743 = vmatprep.subr.mxu0 0.0
      %1744 = vmatpush1.msra.mxu0 0.0
      %1745 = vmatprep.subr.mxu0 0.0
      %1746 = vmatpush1.msra.mxu0 0.0
      %1747 = vmatprep.subr.mxu0 0.0
      %1748 = vmatpush1.msra.mxu0 0.0
      %1749 = vmatprep.subr.mxu0 0.0
      %1750 = vmatpush1.msra.mxu0 0.0
      %1751 = vmatprep.subr.mxu0 0.0
      %1752 = vmatpush1.msra.mxu0 0.0
      %1753 = vmatprep.subr.mxu0 0.0
      %1754 = vmatpush1.msra.mxu0 0.0
      %1755 = vmatprep.subr.mxu0 0.0
      %1756 = vmatpush1.msra.mxu0 0.0
      %1757 = vmatprep.subr.mxu0 0.0
      %1758 = vmatpush1.msra.mxu0 0.0
      %1759 = vmatprep.subr.mxu0 0.0
      %1760 = vmatpush1.msra.mxu0 0.0
      %1761 = vmatprep.subr.mxu0 0.0
      %1762 = vmatpush1.msra.mxu0 0.0
      %1763 = vmatprep.subr.mxu0 0.0
      %1764 = vmatpush1.msra.mxu0 0.0
      %1765 = vmatprep.subr.mxu0 0.0
      %1766 = vmatpush1.msra.mxu0 0.0
      %1767 = vmatprep.subr.mxu0 0.0
      %1768 = vmatpush1.msra.mxu0 0.0
      %1769 = vmatprep.subr.mxu0 0.0
      %1770 = vmatpush1.msra.mxu0 0.0
      %1771 = vmatprep.subr.mxu0 0.0
      %1772 = vmatpush1.msra.mxu0 0.0
      %1773 = vmatprep.subr.mxu0 0.0
      %1774 = vmatpush1.msra.mxu0 0.0
      %1775 = vmatprep.subr.mxu0 0.0
      %1776 = vmatpush1.msra.mxu0 0.0
      %1777 = vmatprep.subr.mxu0 0.0
      %1778 = vmatpush1.msra.mxu0 0.0
      %1779 = vmatprep.subr.mxu0 0.0
      %1780 = vmatpush1.msra.mxu0 0.0
      %1781 = vmatprep.subr.mxu0 0.0
      %1782 = vmatpush1.msra.mxu0 0.0
      %1783 = vmatprep.subr.mxu0 0.0
      %1784 = vmatpush1.msra.mxu0 0.0
      %1785 = vmatprep.mubr.f32.mxu0 0.0
      %1786 = vmatmul.mubr.f32.gmra.mrb[0].mxu0 %v1719
      %v1787 = vpop.f32.mrb[0].mxu0
      %v1788 = vadd.f32 0.0, %v1787
      %v1789 = vpop.f32.mrb[0].mxu0
      %v1790 = vadd.f32 0.0, %v1789
      %1791 = vdwg.mxu0
      %v1792 = vadd.f32 %v1708, %v1788
      %v1793 = vadd.f32 %v1709, %v1790
      %v1794 = vld [vmem:[%s4] sm:$0xff]
      %1796 = vset.pattern.permute.xlu0 0
      %1797 = vperm.xlu0 %1796, %v1794
      %v1798 = vpop.permute.xlu0 %1797
      %v1800 = vadd.f32 %v1792, %v1798
      %v1801 = vadd.f32 %v1793, %v1798
      %1802 = vst [vmem:[%s224] sm:$0xff] %v1800
      %1803 = vst [vmem:[%s224 + $0x8] sm:$0xff] %v1801
      %p1804 = scmp.lt.s32.totalorder %s16, 1
      %s1805 = scalar_select %p1804, %s16, 1
      %s1806 = smul.addr %s1805, 2
      %s1807 = smul.addr %s1806, 8
      %s1808 = scalar_lea.vmem %s5, %s1807
      // Predicated region
      $region41: #{block_forward.1} parent=39 // pred_check
        %p1809 = pneg %p144
      $region42: #{block_forward.1} parent=39 // pred_check_branch
        %1811 = sbr.rel (%p1809) target = $region44
      $region43: #{block_forward.1} parent=39 // pred_region
        _
      $region44: #{block_forward.1} parent=39 // pred_fallthru
        _
    $region40: #{block_forward.1} parent=5 // pred_fallthru
      _
    %p1812 = scmp.le.s32.totalorder 2, %s11
    // Predicated region
    $region45: #{block_forward.1} parent=5 // pred_check
      %p1813 = pneg %p1812
    $region46: #{block_forward.1} parent=5 // pred_check_branch
      %1815 = sbr.rel (%p1813) target = $region48
    $region47: #{block_forward.1} parent=5 // pred_region
      %s1816 = ssub.s32 %s11, 2
      // Predicated region
      $region49: #{block_forward.1} parent=47 // pred_check
        %p1817 = pneg %p150
      $region50: #{block_forward.1} parent=47 // pred_check_branch
        %1819 = sbr.rel (%p1817) target = $region52
      $region51: #{block_forward.1} parent=47 // pred_region
        %p1820 = scmp.lt.s32.totalorder %s17, 1
        %s1821 = scalar_select %p1820, %s17, 1
        %s1822 = smul.addr %s1821, 2
        %s1823 = smul.addr %s1822, 8
        %s1824 = scalar_lea.vmem %s5, %s1823
      $region52: #{block_forward.1} parent=47 // pred_fallthru
        _
    $region48: #{block_forward.1} parent=5 // pred_fallthru
      _
  $region6: #{block_forward.1} parent=0 // loop_footer
    %s15 = sadd.s32 1, %s11
  $region7: #{block_forward.1} parent=0 // loop_footer_branch
    %10 = sbr.rel target = $region3
  $region8: #{block_forward.1} parent=0 // loop_exit
    _

</llo_original>
